<compile_context>
chip_gen: v5e
topology: v5e:2x2
jax: 0.10.0
libtpu: 0.0.40
codegen_flags: <defaults>
</compile_context>

<pallas_src>
import jax
import jax.numpy as jnp
from jax.experimental import pallas as pl
from jax.experimental.pallas import tpu as pltpu

BN_EPS = 1e-5
FEATS = (9, 32, 16, 8, 4, 2, 1)   # layer widths
N_LAYERS = 6

# ---- VMEM parameter slab layout: (4, 32, 32) f32 -------------------------------
#   plane l (l=0,1,2): weight of layer l in the top-left (fout, fin) corner
#   plane 3: per-feature columns -> bias_l at col 0+l, gamma_l at col 3+l,
#            beta_l at col 6+l (l = 0,1,2)
_B_COL, _G_COL, _BE_COL = 0, 3, 6

# ---- SMEM scalar slab layout: (64,) f32 ----------------------------------------
W3_OFF, B3_OFF = 0, 32            # fc4: 8->4 weights (row-major), bias
G4_OFF, BE4_OFF = 36, 40          # bn4 gamma/beta
W4_OFF, B4_OFF = 44, 52           # fc5: 4->2 weights, bias
G5_OFF, BE5_OFF = 54, 56          # bn5 gamma/beta
W5_OFF, B5_OFF = 58, 60           # fc6: 2->1 weights, bias
SMEM_LEN = 64


def _elu(x):
    # F.elu, alpha=1.0.  Single EUP transcendental; where() select keeps the
    # unselected exp(large x)=inf branch harmless.
    return jnp.where(x > 0.0, x, jnp.exp(x) - 1.0)


def _bn_stack(h, gamma, beta, inv_n):
    """Train-mode BatchNorm1d on a stacked (fout, batch) tile.

    gamma/beta are (fout, 1) columns.  One-pass stats: sum and sum-of-squares
    are independent lane reductions; BN is folded into one FMA per element.
    """
    s1 = jnp.sum(h, axis=1, keepdims=True)
    s2 = jnp.sum(h * h, axis=1, keepdims=True)
    mu = s1 * inv_n
    var = jnp.maximum(s2 * inv_n - mu * mu, 0.0)
    scale = gamma * jax.lax.rsqrt(var + BN_EPS)
    shift = beta - mu * scale
    return h * scale + shift


def _bn_row(r, gamma, beta, inv_n):
    """Same BN, on a single (1, batch) row with scalar gamma/beta (from SMEM)."""
    s1 = jnp.sum(r, axis=1, keepdims=True)
    s2 = jnp.sum(r * r, axis=1, keepdims=True)
    mu = s1 * inv_n
    var = jnp.maximum(s2 * inv_n - mu * mu, 0.0)
    scale = gamma * jax.lax.rsqrt(var + BN_EPS)
    shift = beta - mu * scale
    return r * scale + shift


def _tail_linear(rows, s_ref, w_off, b_off, fin, fout):
    """Linear layer on per-row (1, batch) vectors with SMEM scalar weights."""
    out = []
    for j in range(fout):
        r = rows[0] * s_ref[w_off + j * fin]
        for i in range(1, fin):
            r = r + rows[i] * s_ref[w_off + j * fin + i]
        out.append(r + s_ref[b_off + j])
    return out


def net_kernel(x_ref, p_ref, s_ref, o_ref):
    """x_ref: (batch, 9) f32.   p_ref: (4, 32, 32) f32 VMEM param slab.
    s_ref: (64,) f32 SMEM scalar slab.   o_ref: (1, batch) f32 sigmoid outputs.
    """
    batch = x_ref.shape[0]
    inv_n = 1.0 / float(batch)

    x = x_ref[...]                                             # (batch, 9)

    # ---- layer 1: 9 -> 32 on the MXU.  Contract x's feature dim so the result
    # is (32, batch) with batch on lanes (no host-side transpose needed).
    h = jax.lax.dot_general(p_ref[0, :32, :9], x,
                            dimension_numbers=(((1,), (1,)), ((), ())),
                            preferred_element_type=jnp.float32)
    h = h + p_ref[3, :32, _B_COL + 0:_B_COL + 1]
    h = _bn_stack(_elu(h), p_ref[3, :32, _G_COL + 0:_G_COL + 1],
                  p_ref[3, :32, _BE_COL + 0:_BE_COL + 1], inv_n)

    # ---- layer 2: 32 -> 16 (MXU)
    h = jnp.dot(p_ref[1, :16, :32], h, preferred_element_type=jnp.float32)
    h = h + p_ref[3, :16, _B_COL + 1:_B_COL + 2]
    h = _bn_stack(_elu(h), p_ref[3, :16, _G_COL + 1:_G_COL + 2],
                  p_ref[3, :16, _BE_COL + 1:_BE_COL + 2], inv_n)

    # ---- layer 3: 16 -> 8 (MXU)
    h = jnp.dot(p_ref[2, :8, :16], h, preferred_element_type=jnp.float32)
    h = h + p_ref[3, :8, _B_COL + 2:_B_COL + 3]
    h = _bn_stack(_elu(h), p_ref[3, :8, _G_COL + 2:_G_COL + 3],
                  p_ref[3, :8, _BE_COL + 2:_BE_COL + 3], inv_n)

    # ---- tail: per-row (1, batch) vectors, SMEM scalar-splat MACs (VPU only).
    rows = [h[i:i + 1, :] for i in range(8)]

    # layer 4: 8 -> 4, ELU, BN4
    rows = _tail_linear(rows, s_ref, W3_OFF, B3_OFF, 8, 4)
    rows = [_bn_row(_elu(r), s_ref[G4_OFF + j], s_ref[BE4_OFF + j], inv_n)
            for j, r in enumerate(rows)]

    # layer 5: 4 -> 2, ELU, BN5
    rows = _tail_linear(rows, s_ref, W4_OFF, B4_OFF, 4, 2)
    rows = [_bn_row(_elu(r), s_ref[G5_OFF + j], s_ref[BE5_OFF + j], inv_n)
            for j, r in enumerate(rows)]

    # layer 6: 2 -> 1, sigmoid
    rows = _tail_linear(rows, s_ref, W5_OFF, B5_OFF, 2, 1)
    o_ref[...] = jax.nn.sigmoid(rows[0])


def pack_params(weights, biases, gammas, betas):
    """Pack per-layer params into one VMEM slab + one SMEM scalar slab."""
    p = jnp.zeros((4, 32, 32), jnp.float32)
    for l in range(3):
        w = weights[l]
        p = p.at[l, :w.shape[0], :w.shape[1]].set(w)
        p = p.at[3, :biases[l].shape[0], _B_COL + l].set(biases[l])
        p = p.at[3, :gammas[l].shape[0], _G_COL + l].set(gammas[l])
        p = p.at[3, :betas[l].shape[0], _BE_COL + l].set(betas[l])

    s = jnp.zeros((SMEM_LEN,), jnp.float32)
    s = s.at[W3_OFF:W3_OFF + 32].set(weights[3].reshape(-1))
    s = s.at[B3_OFF:B3_OFF + 4].set(biases[3])
    s = s.at[G4_OFF:G4_OFF + 4].set(gammas[3])
    s = s.at[BE4_OFF:BE4_OFF + 4].set(betas[3])
    s = s.at[W4_OFF:W4_OFF + 8].set(weights[4].reshape(-1))
    s = s.at[B4_OFF:B4_OFF + 2].set(biases[4])
    s = s.at[G5_OFF:G5_OFF + 2].set(gammas[4])
    s = s.at[BE5_OFF:BE5_OFF + 2].set(betas[4])
    s = s.at[W5_OFF:W5_OFF + 2].set(weights[5].reshape(-1))
    s = s.at[B5_OFF:B5_OFF + 1].set(biases[5])
    return p, s


def make_params(key):
    """Deterministic init mirroring the module.

    Weights: kaiming_uniform_(..., nonlinearity='leaky_relu') with default a=0,
    i.e. bound = sqrt(2) * sqrt(3 / fan_in), stored (fan_out, fan_in).
    Biases: PyTorch Linear default U(-1/sqrt(fan_in), 1/sqrt(fan_in)).
    BatchNorm: gamma = 1, beta = 0.
    """
    weights, biases, gammas, betas = [], [], [], []
    for i in range(N_LAYERS):
        fan_in, fan_out = FEATS[i], FEATS[i + 1]
        key, kw, kb = jax.random.split(key, 3)
        w_bound = (2.0 ** 0.5) * (3.0 / fan_in) ** 0.5
        w = jax.random.uniform(kw, (fan_out, fan_in), jnp.float32, -w_bound, w_bound)
        b_bound = 1.0 / (fan_in ** 0.5)
        b = jax.random.uniform(kb, (fan_out,), jnp.float32, -b_bound, b_bound)
        weights.append(w)
        biases.append(b)
        if i < N_LAYERS - 1:
            gammas.append(jnp.ones((fan_out,), jnp.float32))
            betas.append(jnp.zeros((fan_out,), jnp.float32))
    return pack_params(weights, biases, gammas, betas)


@jax.jit
def net_forward(x, p_slab, s_slab):
    batch = x.shape[0]
    vmem = pl.BlockSpec(memory_space=pltpu.MemorySpace.VMEM)
    smem = pl.BlockSpec(memory_space=pltpu.MemorySpace.SMEM)
    out = pl.pallas_call(
        net_kernel,
        out_shape=jax.ShapeDtypeStruct((1, batch), jnp.float32),
        in_specs=[vmem, vmem, smem],
        out_specs=vmem,
        # 32 MiB is safe on every generation (live VMEM here is tens of KiB);
        # would cap ~48 MiB on v7x if raised for big batches.
        compiler_params=pltpu.CompilerParams(vmem_limit_bytes=32 * 1024 * 1024),
    )(x.astype(jnp.float32), p_slab, s_slab)
    return out.reshape(batch, 1)


if __name__ == "__main__":
    key = jax.random.PRNGKey(0)
    key, kx, kp = jax.random.split(key, 3)

    batch = 8
    x = jax.random.normal(kx, (batch, 9), jnp.float32)
    p_slab, s_slab = make_params(kp)

    out = net_forward(x, p_slab, s_slab)
    jax.block_until_ready(out)

    assert out.shape == (batch, 1)
    assert bool(jnp.all(jnp.isfinite(out)))
    assert bool(jnp.all((out >= 0.0) & (out <= 1.0)))
    print("KERNEL_OK")
</pallas_src>

<mosaic_0001>
module attributes {stable_mosaic.version = 11 : i64} {
  func.func @net_kernel(%arg0: memref<8x9xf32, #tpu.memory_space<vmem>>, %arg1: memref<4x32x32xf32, #tpu.memory_space<vmem>>, %arg2: memref<64xf32, #tpu.memory_space<smem>>, %arg3: memref<1x8xf32, #tpu.memory_space<vmem>>) attributes {dimension_semantics = [], scalar_prefetch = 0 : i64, scratch_operands = 0 : i64, tpu.core_type = #tpu.core_type<tc>} {
    %c0 = arith.constant 0 : index
    %c0_0 = arith.constant 0 : index
    %0 = vector.load %arg0[%c0, %c0_0] : memref<8x9xf32, #tpu.memory_space<vmem>>, vector<8x9xf32>
    %c0_1 = arith.constant 0 : index
    %c0_2 = arith.constant 0 : index
    %c0_3 = arith.constant 0 : index
    %1 = vector.load %arg1[%c0_1, %c0_2, %c0_3] : memref<4x32x32xf32, #tpu.memory_space<vmem>>, vector<1x32x9xf32>
    %2 = vector.shape_cast %1 : vector<1x32x9xf32> to vector<32x9xf32>
    %cst = arith.constant dense<0.000000e+00> : vector<32x8xf32>
    %3 = tpu.matmul %2, %0, %cst {dimension_numbers = #tpu.dot_dimension_numbers<[1], [1], [0], [0], [0, 0, 1, 0], [], []>} : vector<32x9xf32>, vector<8x9xf32>, vector<32x8xf32> -> vector<32x8xf32>
    %c3 = arith.constant 3 : index
    %c0_4 = arith.constant 0 : index
    %c0_5 = arith.constant 0 : index
    %4 = vector.load %arg1[%c3, %c0_4, %c0_5] : memref<4x32x32xf32, #tpu.memory_space<vmem>>, vector<1x32x1xf32>
    %5 = vector.shape_cast %4 : vector<1x32x1xf32> to vector<32x1xf32>
    %6 = vector.broadcast %5 : vector<32x1xf32> to vector<32x8xf32>
    %7 = arith.addf %3, %6 : vector<32x8xf32>
    %cst_6 = arith.constant 0.000000e+00 : f32
    %8 = vector.broadcast %cst_6 : f32 to vector<32x8xf32>
    %9 = arith.cmpf ogt, %7, %8 : vector<32x8xf32>
    %10 = math.exp %7 : vector<32x8xf32>
    %cst_7 = arith.constant 1.000000e+00 : f32
    %11 = vector.broadcast %cst_7 : f32 to vector<32x8xf32>
    %12 = arith.subf %10, %11 : vector<32x8xf32>
    %13 = arith.select %9, %7, %12 : vector<32x8xi1>, vector<32x8xf32>
    %c3_8 = arith.constant 3 : index
    %c0_9 = arith.constant 0 : index
    %c3_10 = arith.constant 3 : index
    %14 = vector.load %arg1[%c3_8, %c0_9, %c3_10] : memref<4x32x32xf32, #tpu.memory_space<vmem>>, vector<1x32x1xf32>
    %15 = vector.shape_cast %14 : vector<1x32x1xf32> to vector<32x1xf32>
    %c3_11 = arith.constant 3 : index
    %c0_12 = arith.constant 0 : index
    %c6 = arith.constant 6 : index
    %16 = vector.load %arg1[%c3_11, %c0_12, %c6] : memref<4x32x32xf32, #tpu.memory_space<vmem>>, vector<1x32x1xf32>
    %17 = vector.shape_cast %16 : vector<1x32x1xf32> to vector<32x1xf32>
    %cst_13 = arith.constant dense<0.000000e+00> : vector<32xf32>
    %18 = vector.multi_reduction <add>, %13, %cst_13 [1] : vector<32x8xf32> to vector<32xf32>
    %19 = vector.shape_cast %18 : vector<32xf32> to vector<32x1xf32>
    %20 = arith.mulf %13, %13 : vector<32x8xf32>
    %cst_14 = arith.constant dense<0.000000e+00> : vector<32xf32>
    %21 = vector.multi_reduction <add>, %20, %cst_14 [1] : vector<32x8xf32> to vector<32xf32>
    %22 = vector.shape_cast %21 : vector<32xf32> to vector<32x1xf32>
    %cst_15 = arith.constant 1.250000e-01 : f32
    %23 = vector.broadcast %cst_15 : f32 to vector<32x1xf32>
    %24 = arith.mulf %19, %23 : vector<32x1xf32>
    %cst_16 = arith.constant 1.250000e-01 : f32
    %25 = vector.broadcast %cst_16 : f32 to vector<32x1xf32>
    %26 = arith.mulf %22, %25 : vector<32x1xf32>
    %27 = arith.mulf %24, %24 : vector<32x1xf32>
    %28 = arith.subf %26, %27 : vector<32x1xf32>
    %cst_17 = arith.constant 0.000000e+00 : f32
    %29 = vector.broadcast %cst_17 : f32 to vector<32x1xf32>
    %30 = arith.maximumf %28, %29 : vector<32x1xf32>
    %cst_18 = arith.constant 9.99999974E-6 : f32
    %31 = vector.broadcast %cst_18 : f32 to vector<32x1xf32>
    %32 = arith.addf %30, %31 : vector<32x1xf32>
    %33 = math.rsqrt %32 : vector<32x1xf32>
    %34 = arith.mulf %15, %33 : vector<32x1xf32>
    %35 = arith.mulf %24, %34 : vector<32x1xf32>
    %36 = arith.subf %17, %35 : vector<32x1xf32>
    %37 = vector.broadcast %34 : vector<32x1xf32> to vector<32x8xf32>
    %38 = arith.mulf %13, %37 : vector<32x8xf32>
    %39 = vector.broadcast %36 : vector<32x1xf32> to vector<32x8xf32>
    %40 = arith.addf %38, %39 : vector<32x8xf32>
    %c1 = arith.constant 1 : index
    %c0_19 = arith.constant 0 : index
    %c0_20 = arith.constant 0 : index
    %41 = vector.load %arg1[%c1, %c0_19, %c0_20] : memref<4x32x32xf32, #tpu.memory_space<vmem>>, vector<1x16x32xf32>
    %42 = vector.shape_cast %41 : vector<1x16x32xf32> to vector<16x32xf32>
    %cst_21 = arith.constant dense<0.000000e+00> : vector<16x8xf32>
    %43 = tpu.matmul %42, %40, %cst_21 {dimension_numbers = #tpu.dot_dimension_numbers<[1], [0], [0], [1], [0, 0, 1, 1], [], []>} : vector<16x32xf32>, vector<32x8xf32>, vector<16x8xf32> -> vector<16x8xf32>
    %c3_22 = arith.constant 3 : index
    %c0_23 = arith.constant 0 : index
    %c1_24 = arith.constant 1 : index
    %44 = vector.load %arg1[%c3_22, %c0_23, %c1_24] : memref<4x32x32xf32, #tpu.memory_space<vmem>>, vector<1x16x1xf32>
    %45 = vector.shape_cast %44 : vector<1x16x1xf32> to vector<16x1xf32>
    %46 = vector.broadcast %45 : vector<16x1xf32> to vector<16x8xf32>
    %47 = arith.addf %43, %46 : vector<16x8xf32>
    %cst_25 = arith.constant 0.000000e+00 : f32
    %48 = vector.broadcast %cst_25 : f32 to vector<16x8xf32>
    %49 = arith.cmpf ogt, %47, %48 : vector<16x8xf32>
    %50 = math.exp %47 : vector<16x8xf32>
    %cst_26 = arith.constant 1.000000e+00 : f32
    %51 = vector.broadcast %cst_26 : f32 to vector<16x8xf32>
    %52 = arith.subf %50, %51 : vector<16x8xf32>
    %53 = arith.select %49, %47, %52 : vector<16x8xi1>, vector<16x8xf32>
    %c3_27 = arith.constant 3 : index
    %c0_28 = arith.constant 0 : index
    %c4 = arith.constant 4 : index
    %54 = vector.load %arg1[%c3_27, %c0_28, %c4] : memref<4x32x32xf32, #tpu.memory_space<vmem>>, vector<1x16x1xf32>
    %55 = vector.shape_cast %54 : vector<1x16x1xf32> to vector<16x1xf32>
    %c3_29 = arith.constant 3 : index
    %c0_30 = arith.constant 0 : index
    %c7 = arith.constant 7 : index
    %56 = vector.load %arg1[%c3_29, %c0_30, %c7] : memref<4x32x32xf32, #tpu.memory_space<vmem>>, vector<1x16x1xf32>
    %57 = vector.shape_cast %56 : vector<1x16x1xf32> to vector<16x1xf32>
    %cst_31 = arith.constant dense<0.000000e+00> : vector<16xf32>
    %58 = vector.multi_reduction <add>, %53, %cst_31 [1] : vector<16x8xf32> to vector<16xf32>
    %59 = vector.shape_cast %58 : vector<16xf32> to vector<16x1xf32>
    %60 = arith.mulf %53, %53 : vector<16x8xf32>
    %cst_32 = arith.constant dense<0.000000e+00> : vector<16xf32>
    %61 = vector.multi_reduction <add>, %60, %cst_32 [1] : vector<16x8xf32> to vector<16xf32>
    %62 = vector.shape_cast %61 : vector<16xf32> to vector<16x1xf32>
    %cst_33 = arith.constant 1.250000e-01 : f32
    %63 = vector.broadcast %cst_33 : f32 to vector<16x1xf32>
    %64 = arith.mulf %59, %63 : vector<16x1xf32>
    %cst_34 = arith.constant 1.250000e-01 : f32
    %65 = vector.broadcast %cst_34 : f32 to vector<16x1xf32>
    %66 = arith.mulf %62, %65 : vector<16x1xf32>
    %67 = arith.mulf %64, %64 : vector<16x1xf32>
    %68 = arith.subf %66, %67 : vector<16x1xf32>
    %cst_35 = arith.constant 0.000000e+00 : f32
    %69 = vector.broadcast %cst_35 : f32 to vector<16x1xf32>
    %70 = arith.maximumf %68, %69 : vector<16x1xf32>
    %cst_36 = arith.constant 9.99999974E-6 : f32
    %71 = vector.broadcast %cst_36 : f32 to vector<16x1xf32>
    %72 = arith.addf %70, %71 : vector<16x1xf32>
    %73 = math.rsqrt %72 : vector<16x1xf32>
    %74 = arith.mulf %55, %73 : vector<16x1xf32>
    %75 = arith.mulf %64, %74 : vector<16x1xf32>
    %76 = arith.subf %57, %75 : vector<16x1xf32>
    %77 = vector.broadcast %74 : vector<16x1xf32> to vector<16x8xf32>
    %78 = arith.mulf %53, %77 : vector<16x8xf32>
    %79 = vector.broadcast %76 : vector<16x1xf32> to vector<16x8xf32>
    %80 = arith.addf %78, %79 : vector<16x8xf32>
    %c2 = arith.constant 2 : index
    %c0_37 = arith.constant 0 : index
    %c0_38 = arith.constant 0 : index
    %81 = vector.load %arg1[%c2, %c0_37, %c0_38] : memref<4x32x32xf32, #tpu.memory_space<vmem>>, vector<1x8x16xf32>
    %82 = vector.shape_cast %81 : vector<1x8x16xf32> to vector<8x16xf32>
    %cst_39 = arith.constant dense<0.000000e+00> : vector<8x8xf32>
    %83 = tpu.matmul %82, %80, %cst_39 {dimension_numbers = #tpu.dot_dimension_numbers<[1], [0], [0], [1], [0, 0, 1, 1], [], []>} : vector<8x16xf32>, vector<16x8xf32>, vector<8x8xf32> -> vector<8x8xf32>
    %c3_40 = arith.constant 3 : index
    %c0_41 = arith.constant 0 : index
    %c2_42 = arith.constant 2 : index
    %84 = vector.load %arg1[%c3_40, %c0_41, %c2_42] : memref<4x32x32xf32, #tpu.memory_space<vmem>>, vector<1x8x1xf32>
    %85 = vector.shape_cast %84 : vector<1x8x1xf32> to vector<8x1xf32>
    %86 = vector.broadcast %85 : vector<8x1xf32> to vector<8x8xf32>
    %87 = arith.addf %83, %86 : vector<8x8xf32>
    %cst_43 = arith.constant 0.000000e+00 : f32
    %88 = vector.broadcast %cst_43 : f32 to vector<8x8xf32>
    %89 = arith.cmpf ogt, %87, %88 : vector<8x8xf32>
    %90 = math.exp %87 : vector<8x8xf32>
    %cst_44 = arith.constant 1.000000e+00 : f32
    %91 = vector.broadcast %cst_44 : f32 to vector<8x8xf32>
    %92 = arith.subf %90, %91 : vector<8x8xf32>
    %93 = arith.select %89, %87, %92 : vector<8x8xi1>, vector<8x8xf32>
    %c3_45 = arith.constant 3 : index
    %c0_46 = arith.constant 0 : index
    %c5 = arith.constant 5 : index
    %94 = vector.load %arg1[%c3_45, %c0_46, %c5] : memref<4x32x32xf32, #tpu.memory_space<vmem>>, vector<1x8x1xf32>
    %95 = vector.shape_cast %94 : vector<1x8x1xf32> to vector<8x1xf32>
    %c3_47 = arith.constant 3 : index
    %c0_48 = arith.constant 0 : index
    %c8 = arith.constant 8 : index
    %96 = vector.load %arg1[%c3_47, %c0_48, %c8] : memref<4x32x32xf32, #tpu.memory_space<vmem>>, vector<1x8x1xf32>
    %97 = vector.shape_cast %96 : vector<1x8x1xf32> to vector<8x1xf32>
    %cst_49 = arith.constant dense<0.000000e+00> : vector<8xf32>
    %98 = vector.multi_reduction <add>, %93, %cst_49 [1] : vector<8x8xf32> to vector<8xf32>
    %99 = vector.shape_cast %98 : vector<8xf32> to vector<8x1xf32>
    %100 = arith.mulf %93, %93 : vector<8x8xf32>
    %cst_50 = arith.constant dense<0.000000e+00> : vector<8xf32>
    %101 = vector.multi_reduction <add>, %100, %cst_50 [1] : vector<8x8xf32> to vector<8xf32>
    %102 = vector.shape_cast %101 : vector<8xf32> to vector<8x1xf32>
    %cst_51 = arith.constant 1.250000e-01 : f32
    %103 = vector.broadcast %cst_51 : f32 to vector<8x1xf32>
    %104 = arith.mulf %99, %103 : vector<8x1xf32>
    %cst_52 = arith.constant 1.250000e-01 : f32
    %105 = vector.broadcast %cst_52 : f32 to vector<8x1xf32>
    %106 = arith.mulf %102, %105 : vector<8x1xf32>
    %107 = arith.mulf %104, %104 : vector<8x1xf32>
    %108 = arith.subf %106, %107 : vector<8x1xf32>
    %cst_53 = arith.constant 0.000000e+00 : f32
    %109 = vector.broadcast %cst_53 : f32 to vector<8x1xf32>
    %110 = arith.maximumf %108, %109 : vector<8x1xf32>
    %cst_54 = arith.constant 9.99999974E-6 : f32
    %111 = vector.broadcast %cst_54 : f32 to vector<8x1xf32>
    %112 = arith.addf %110, %111 : vector<8x1xf32>
    %113 = math.rsqrt %112 : vector<8x1xf32>
    %114 = arith.mulf %95, %113 : vector<8x1xf32>
    %115 = arith.mulf %104, %114 : vector<8x1xf32>
    %116 = arith.subf %97, %115 : vector<8x1xf32>
    %117 = vector.broadcast %114 : vector<8x1xf32> to vector<8x8xf32>
    %118 = arith.mulf %93, %117 : vector<8x8xf32>
    %119 = vector.broadcast %116 : vector<8x1xf32> to vector<8x8xf32>
    %120 = arith.addf %118, %119 : vector<8x8xf32>
    %121 = vector.extract_strided_slice %120 {offsets = [0, 0], sizes = [1, 8], strides = [1, 1]} : vector<8x8xf32> to vector<1x8xf32>
    %122 = vector.extract_strided_slice %120 {offsets = [1, 0], sizes = [1, 8], strides = [1, 1]} : vector<8x8xf32> to vector<1x8xf32>
    %123 = vector.extract_strided_slice %120 {offsets = [2, 0], sizes = [1, 8], strides = [1, 1]} : vector<8x8xf32> to vector<1x8xf32>
    %124 = vector.extract_strided_slice %120 {offsets = [3, 0], sizes = [1, 8], strides = [1, 1]} : vector<8x8xf32> to vector<1x8xf32>
    %125 = vector.extract_strided_slice %120 {offsets = [4, 0], sizes = [1, 8], strides = [1, 1]} : vector<8x8xf32> to vector<1x8xf32>
    %126 = vector.extract_strided_slice %120 {offsets = [5, 0], sizes = [1, 8], strides = [1, 1]} : vector<8x8xf32> to vector<1x8xf32>
    %127 = vector.extract_strided_slice %120 {offsets = [6, 0], sizes = [1, 8], strides = [1, 1]} : vector<8x8xf32> to vector<1x8xf32>
    %128 = vector.extract_strided_slice %120 {offsets = [7, 0], sizes = [1, 8], strides = [1, 1]} : vector<8x8xf32> to vector<1x8xf32>
    %c0_55 = arith.constant 0 : index
    %129 = memref.load %arg2[%c0_55] : memref<64xf32, #tpu.memory_space<smem>>
    %130 = vector.broadcast %129 : f32 to vector<1x8xf32>
    %131 = arith.mulf %121, %130 : vector<1x8xf32>
    %c1_56 = arith.constant 1 : index
    %132 = memref.load %arg2[%c1_56] : memref<64xf32, #tpu.memory_space<smem>>
    %133 = vector.broadcast %132 : f32 to vector<1x8xf32>
    %134 = arith.mulf %122, %133 : vector<1x8xf32>
    %135 = arith.addf %131, %134 : vector<1x8xf32>
    %c2_57 = arith.constant 2 : index
    %136 = memref.load %arg2[%c2_57] : memref<64xf32, #tpu.memory_space<smem>>
    %137 = vector.broadcast %136 : f32 to vector<1x8xf32>
    %138 = arith.mulf %123, %137 : vector<1x8xf32>
    %139 = arith.addf %135, %138 : vector<1x8xf32>
    %c3_58 = arith.constant 3 : index
    %140 = memref.load %arg2[%c3_58] : memref<64xf32, #tpu.memory_space<smem>>
    %141 = vector.broadcast %140 : f32 to vector<1x8xf32>
    %142 = arith.mulf %124, %141 : vector<1x8xf32>
    %143 = arith.addf %139, %142 : vector<1x8xf32>
    %c4_59 = arith.constant 4 : index
    %144 = memref.load %arg2[%c4_59] : memref<64xf32, #tpu.memory_space<smem>>
    %145 = vector.broadcast %144 : f32 to vector<1x8xf32>
    %146 = arith.mulf %125, %145 : vector<1x8xf32>
    %147 = arith.addf %143, %146 : vector<1x8xf32>
    %c5_60 = arith.constant 5 : index
    %148 = memref.load %arg2[%c5_60] : memref<64xf32, #tpu.memory_space<smem>>
    %149 = vector.broadcast %148 : f32 to vector<1x8xf32>
    %150 = arith.mulf %126, %149 : vector<1x8xf32>
    %151 = arith.addf %147, %150 : vector<1x8xf32>
    %c6_61 = arith.constant 6 : index
    %152 = memref.load %arg2[%c6_61] : memref<64xf32, #tpu.memory_space<smem>>
    %153 = vector.broadcast %152 : f32 to vector<1x8xf32>
    %154 = arith.mulf %127, %153 : vector<1x8xf32>
    %155 = arith.addf %151, %154 : vector<1x8xf32>
    %c7_62 = arith.constant 7 : index
    %156 = memref.load %arg2[%c7_62] : memref<64xf32, #tpu.memory_space<smem>>
    %157 = vector.broadcast %156 : f32 to vector<1x8xf32>
    %158 = arith.mulf %128, %157 : vector<1x8xf32>
    %159 = arith.addf %155, %158 : vector<1x8xf32>
    %c32 = arith.constant 32 : index
    %160 = memref.load %arg2[%c32] : memref<64xf32, #tpu.memory_space<smem>>
    %161 = vector.broadcast %160 : f32 to vector<1x8xf32>
    %162 = arith.addf %159, %161 : vector<1x8xf32>
    %c8_63 = arith.constant 8 : index
    %163 = memref.load %arg2[%c8_63] : memref<64xf32, #tpu.memory_space<smem>>
    %164 = vector.broadcast %163 : f32 to vector<1x8xf32>
    %165 = arith.mulf %121, %164 : vector<1x8xf32>
    %c9 = arith.constant 9 : index
    %166 = memref.load %arg2[%c9] : memref<64xf32, #tpu.memory_space<smem>>
    %167 = vector.broadcast %166 : f32 to vector<1x8xf32>
    %168 = arith.mulf %122, %167 : vector<1x8xf32>
    %169 = arith.addf %165, %168 : vector<1x8xf32>
    %c10 = arith.constant 10 : index
    %170 = memref.load %arg2[%c10] : memref<64xf32, #tpu.memory_space<smem>>
    %171 = vector.broadcast %170 : f32 to vector<1x8xf32>
    %172 = arith.mulf %123, %171 : vector<1x8xf32>
    %173 = arith.addf %169, %172 : vector<1x8xf32>
    %c11 = arith.constant 11 : index
    %174 = memref.load %arg2[%c11] : memref<64xf32, #tpu.memory_space<smem>>
    %175 = vector.broadcast %174 : f32 to vector<1x8xf32>
    %176 = arith.mulf %124, %175 : vector<1x8xf32>
    %177 = arith.addf %173, %176 : vector<1x8xf32>
    %c12 = arith.constant 12 : index
    %178 = memref.load %arg2[%c12] : memref<64xf32, #tpu.memory_space<smem>>
    %179 = vector.broadcast %178 : f32 to vector<1x8xf32>
    %180 = arith.mulf %125, %179 : vector<1x8xf32>
    %181 = arith.addf %177, %180 : vector<1x8xf32>
    %c13 = arith.constant 13 : index
    %182 = memref.load %arg2[%c13] : memref<64xf32, #tpu.memory_space<smem>>
    %183 = vector.broadcast %182 : f32 to vector<1x8xf32>
    %184 = arith.mulf %126, %183 : vector<1x8xf32>
    %185 = arith.addf %181, %184 : vector<1x8xf32>
    %c14 = arith.constant 14 : index
    %186 = memref.load %arg2[%c14] : memref<64xf32, #tpu.memory_space<smem>>
    %187 = vector.broadcast %186 : f32 to vector<1x8xf32>
    %188 = arith.mulf %127, %187 : vector<1x8xf32>
    %189 = arith.addf %185, %188 : vector<1x8xf32>
    %c15 = arith.constant 15 : index
    %190 = memref.load %arg2[%c15] : memref<64xf32, #tpu.memory_space<smem>>
    %191 = vector.broadcast %190 : f32 to vector<1x8xf32>
    %192 = arith.mulf %128, %191 : vector<1x8xf32>
    %193 = arith.addf %189, %192 : vector<1x8xf32>
    %c33 = arith.constant 33 : index
    %194 = memref.load %arg2[%c33] : memref<64xf32, #tpu.memory_space<smem>>
    %195 = vector.broadcast %194 : f32 to vector<1x8xf32>
    %196 = arith.addf %193, %195 : vector<1x8xf32>
    %c16 = arith.constant 16 : index
    %197 = memref.load %arg2[%c16] : memref<64xf32, #tpu.memory_space<smem>>
    %198 = vector.broadcast %197 : f32 to vector<1x8xf32>
    %199 = arith.mulf %121, %198 : vector<1x8xf32>
    %c17 = arith.constant 17 : index
    %200 = memref.load %arg2[%c17] : memref<64xf32, #tpu.memory_space<smem>>
    %201 = vector.broadcast %200 : f32 to vector<1x8xf32>
    %202 = arith.mulf %122, %201 : vector<1x8xf32>
    %203 = arith.addf %199, %202 : vector<1x8xf32>
    %c18 = arith.constant 18 : index
    %204 = memref.load %arg2[%c18] : memref<64xf32, #tpu.memory_space<smem>>
    %205 = vector.broadcast %204 : f32 to vector<1x8xf32>
    %206 = arith.mulf %123, %205 : vector<1x8xf32>
    %207 = arith.addf %203, %206 : vector<1x8xf32>
    %c19 = arith.constant 19 : index
    %208 = memref.load %arg2[%c19] : memref<64xf32, #tpu.memory_space<smem>>
    %209 = vector.broadcast %208 : f32 to vector<1x8xf32>
    %210 = arith.mulf %124, %209 : vector<1x8xf32>
    %211 = arith.addf %207, %210 : vector<1x8xf32>
    %c20 = arith.constant 20 : index
    %212 = memref.load %arg2[%c20] : memref<64xf32, #tpu.memory_space<smem>>
    %213 = vector.broadcast %212 : f32 to vector<1x8xf32>
    %214 = arith.mulf %125, %213 : vector<1x8xf32>
    %215 = arith.addf %211, %214 : vector<1x8xf32>
    %c21 = arith.constant 21 : index
    %216 = memref.load %arg2[%c21] : memref<64xf32, #tpu.memory_space<smem>>
    %217 = vector.broadcast %216 : f32 to vector<1x8xf32>
    %218 = arith.mulf %126, %217 : vector<1x8xf32>
    %219 = arith.addf %215, %218 : vector<1x8xf32>
    %c22 = arith.constant 22 : index
    %220 = memref.load %arg2[%c22] : memref<64xf32, #tpu.memory_space<smem>>
    %221 = vector.broadcast %220 : f32 to vector<1x8xf32>
    %222 = arith.mulf %127, %221 : vector<1x8xf32>
    %223 = arith.addf %219, %222 : vector<1x8xf32>
    %c23 = arith.constant 23 : index
    %224 = memref.load %arg2[%c23] : memref<64xf32, #tpu.memory_space<smem>>
    %225 = vector.broadcast %224 : f32 to vector<1x8xf32>
    %226 = arith.mulf %128, %225 : vector<1x8xf32>
    %227 = arith.addf %223, %226 : vector<1x8xf32>
    %c34 = arith.constant 34 : index
    %228 = memref.load %arg2[%c34] : memref<64xf32, #tpu.memory_space<smem>>
    %229 = vector.broadcast %228 : f32 to vector<1x8xf32>
    %230 = arith.addf %227, %229 : vector<1x8xf32>
    %c24 = arith.constant 24 : index
    %231 = memref.load %arg2[%c24] : memref<64xf32, #tpu.memory_space<smem>>
    %232 = vector.broadcast %231 : f32 to vector<1x8xf32>
    %233 = arith.mulf %121, %232 : vector<1x8xf32>
    %c25 = arith.constant 25 : index
    %234 = memref.load %arg2[%c25] : memref<64xf32, #tpu.memory_space<smem>>
    %235 = vector.broadcast %234 : f32 to vector<1x8xf32>
    %236 = arith.mulf %122, %235 : vector<1x8xf32>
    %237 = arith.addf %233, %236 : vector<1x8xf32>
    %c26 = arith.constant 26 : index
    %238 = memref.load %arg2[%c26] : memref<64xf32, #tpu.memory_space<smem>>
    %239 = vector.broadcast %238 : f32 to vector<1x8xf32>
    %240 = arith.mulf %123, %239 : vector<1x8xf32>
    %241 = arith.addf %237, %240 : vector<1x8xf32>
    %c27 = arith.constant 27 : index
    %242 = memref.load %arg2[%c27] : memref<64xf32, #tpu.memory_space<smem>>
    %243 = vector.broadcast %242 : f32 to vector<1x8xf32>
    %244 = arith.mulf %124, %243 : vector<1x8xf32>
    %245 = arith.addf %241, %244 : vector<1x8xf32>
    %c28 = arith.constant 28 : index
    %246 = memref.load %arg2[%c28] : memref<64xf32, #tpu.memory_space<smem>>
    %247 = vector.broadcast %246 : f32 to vector<1x8xf32>
    %248 = arith.mulf %125, %247 : vector<1x8xf32>
    %249 = arith.addf %245, %248 : vector<1x8xf32>
    %c29 = arith.constant 29 : index
    %250 = memref.load %arg2[%c29] : memref<64xf32, #tpu.memory_space<smem>>
    %251 = vector.broadcast %250 : f32 to vector<1x8xf32>
    %252 = arith.mulf %126, %251 : vector<1x8xf32>
    %253 = arith.addf %249, %252 : vector<1x8xf32>
    %c30 = arith.constant 30 : index
    %254 = memref.load %arg2[%c30] : memref<64xf32, #tpu.memory_space<smem>>
    %255 = vector.broadcast %254 : f32 to vector<1x8xf32>
    %256 = arith.mulf %127, %255 : vector<1x8xf32>
    %257 = arith.addf %253, %256 : vector<1x8xf32>
    %c31 = arith.constant 31 : index
    %258 = memref.load %arg2[%c31] : memref<64xf32, #tpu.memory_space<smem>>
    %259 = vector.broadcast %258 : f32 to vector<1x8xf32>
    %260 = arith.mulf %128, %259 : vector<1x8xf32>
    %261 = arith.addf %257, %260 : vector<1x8xf32>
    %c35 = arith.constant 35 : index
    %262 = memref.load %arg2[%c35] : memref<64xf32, #tpu.memory_space<smem>>
    %263 = vector.broadcast %262 : f32 to vector<1x8xf32>
    %264 = arith.addf %261, %263 : vector<1x8xf32>
    %cst_64 = arith.constant 0.000000e+00 : f32
    %265 = vector.broadcast %cst_64 : f32 to vector<1x8xf32>
    %266 = arith.cmpf ogt, %162, %265 : vector<1x8xf32>
    %267 = math.exp %162 : vector<1x8xf32>
    %cst_65 = arith.constant 1.000000e+00 : f32
    %268 = vector.broadcast %cst_65 : f32 to vector<1x8xf32>
    %269 = arith.subf %267, %268 : vector<1x8xf32>
    %270 = arith.select %266, %162, %269 : vector<1x8xi1>, vector<1x8xf32>
    %c36 = arith.constant 36 : index
    %271 = memref.load %arg2[%c36] : memref<64xf32, #tpu.memory_space<smem>>
    %c40 = arith.constant 40 : index
    %272 = memref.load %arg2[%c40] : memref<64xf32, #tpu.memory_space<smem>>
    %cst_66 = arith.constant dense<0.000000e+00> : vector<1xf32>
    %273 = vector.multi_reduction <add>, %270, %cst_66 [1] : vector<1x8xf32> to vector<1xf32>
    %274 = vector.shape_cast %273 : vector<1xf32> to vector<1x1xf32>
    %275 = arith.mulf %270, %270 : vector<1x8xf32>
    %cst_67 = arith.constant dense<0.000000e+00> : vector<1xf32>
    %276 = vector.multi_reduction <add>, %275, %cst_67 [1] : vector<1x8xf32> to vector<1xf32>
    %277 = vector.shape_cast %276 : vector<1xf32> to vector<1x1xf32>
    %cst_68 = arith.constant 1.250000e-01 : f32
    %278 = vector.broadcast %cst_68 : f32 to vector<1x1xf32>
    %279 = arith.mulf %274, %278 : vector<1x1xf32>
    %cst_69 = arith.constant 1.250000e-01 : f32
    %280 = vector.broadcast %cst_69 : f32 to vector<1x1xf32>
    %281 = arith.mulf %277, %280 : vector<1x1xf32>
    %282 = arith.mulf %279, %279 : vector<1x1xf32>
    %283 = arith.subf %281, %282 : vector<1x1xf32>
    %cst_70 = arith.constant 0.000000e+00 : f32
    %284 = vector.broadcast %cst_70 : f32 to vector<1x1xf32>
    %285 = arith.maximumf %283, %284 : vector<1x1xf32>
    %cst_71 = arith.constant 9.99999974E-6 : f32
    %286 = vector.broadcast %cst_71 : f32 to vector<1x1xf32>
    %287 = arith.addf %285, %286 : vector<1x1xf32>
    %288 = math.rsqrt %287 : vector<1x1xf32>
    %289 = vector.broadcast %271 : f32 to vector<1x1xf32>
    %290 = arith.mulf %289, %288 : vector<1x1xf32>
    %291 = arith.mulf %279, %290 : vector<1x1xf32>
    %292 = vector.broadcast %272 : f32 to vector<1x1xf32>
    %293 = arith.subf %292, %291 : vector<1x1xf32>
    %294 = vector.broadcast %290 : vector<1x1xf32> to vector<1x8xf32>
    %295 = arith.mulf %270, %294 : vector<1x8xf32>
    %296 = vector.broadcast %293 : vector<1x1xf32> to vector<1x8xf32>
    %297 = arith.addf %295, %296 : vector<1x8xf32>
    %cst_72 = arith.constant 0.000000e+00 : f32
    %298 = vector.broadcast %cst_72 : f32 to vector<1x8xf32>
    %299 = arith.cmpf ogt, %196, %298 : vector<1x8xf32>
    %300 = math.exp %196 : vector<1x8xf32>
    %cst_73 = arith.constant 1.000000e+00 : f32
    %301 = vector.broadcast %cst_73 : f32 to vector<1x8xf32>
    %302 = arith.subf %300, %301 : vector<1x8xf32>
    %303 = arith.select %299, %196, %302 : vector<1x8xi1>, vector<1x8xf32>
    %c37 = arith.constant 37 : index
    %304 = memref.load %arg2[%c37] : memref<64xf32, #tpu.memory_space<smem>>
    %c41 = arith.constant 41 : index
    %305 = memref.load %arg2[%c41] : memref<64xf32, #tpu.memory_space<smem>>
    %cst_74 = arith.constant dense<0.000000e+00> : vector<1xf32>
    %306 = vector.multi_reduction <add>, %303, %cst_74 [1] : vector<1x8xf32> to vector<1xf32>
    %307 = vector.shape_cast %306 : vector<1xf32> to vector<1x1xf32>
    %308 = arith.mulf %303, %303 : vector<1x8xf32>
    %cst_75 = arith.constant dense<0.000000e+00> : vector<1xf32>
    %309 = vector.multi_reduction <add>, %308, %cst_75 [1] : vector<1x8xf32> to vector<1xf32>
    %310 = vector.shape_cast %309 : vector<1xf32> to vector<1x1xf32>
    %cst_76 = arith.constant 1.250000e-01 : f32
    %311 = vector.broadcast %cst_76 : f32 to vector<1x1xf32>
    %312 = arith.mulf %307, %311 : vector<1x1xf32>
    %cst_77 = arith.constant 1.250000e-01 : f32
    %313 = vector.broadcast %cst_77 : f32 to vector<1x1xf32>
    %314 = arith.mulf %310, %313 : vector<1x1xf32>
    %315 = arith.mulf %312, %312 : vector<1x1xf32>
    %316 = arith.subf %314, %315 : vector<1x1xf32>
    %cst_78 = arith.constant 0.000000e+00 : f32
    %317 = vector.broadcast %cst_78 : f32 to vector<1x1xf32>
    %318 = arith.maximumf %316, %317 : vector<1x1xf32>
    %cst_79 = arith.constant 9.99999974E-6 : f32
    %319 = vector.broadcast %cst_79 : f32 to vector<1x1xf32>
    %320 = arith.addf %318, %319 : vector<1x1xf32>
    %321 = math.rsqrt %320 : vector<1x1xf32>
    %322 = vector.broadcast %304 : f32 to vector<1x1xf32>
    %323 = arith.mulf %322, %321 : vector<1x1xf32>
    %324 = arith.mulf %312, %323 : vector<1x1xf32>
    %325 = vector.broadcast %305 : f32 to vector<1x1xf32>
    %326 = arith.subf %325, %324 : vector<1x1xf32>
    %327 = vector.broadcast %323 : vector<1x1xf32> to vector<1x8xf32>
    %328 = arith.mulf %303, %327 : vector<1x8xf32>
    %329 = vector.broadcast %326 : vector<1x1xf32> to vector<1x8xf32>
    %330 = arith.addf %328, %329 : vector<1x8xf32>
    %cst_80 = arith.constant 0.000000e+00 : f32
    %331 = vector.broadcast %cst_80 : f32 to vector<1x8xf32>
    %332 = arith.cmpf ogt, %230, %331 : vector<1x8xf32>
    %333 = math.exp %230 : vector<1x8xf32>
    %cst_81 = arith.constant 1.000000e+00 : f32
    %334 = vector.broadcast %cst_81 : f32 to vector<1x8xf32>
    %335 = arith.subf %333, %334 : vector<1x8xf32>
    %336 = arith.select %332, %230, %335 : vector<1x8xi1>, vector<1x8xf32>
    %c38 = arith.constant 38 : index
    %337 = memref.load %arg2[%c38] : memref<64xf32, #tpu.memory_space<smem>>
    %c42 = arith.constant 42 : index
    %338 = memref.load %arg2[%c42] : memref<64xf32, #tpu.memory_space<smem>>
    %cst_82 = arith.constant dense<0.000000e+00> : vector<1xf32>
    %339 = vector.multi_reduction <add>, %336, %cst_82 [1] : vector<1x8xf32> to vector<1xf32>
    %340 = vector.shape_cast %339 : vector<1xf32> to vector<1x1xf32>
    %341 = arith.mulf %336, %336 : vector<1x8xf32>
    %cst_83 = arith.constant dense<0.000000e+00> : vector<1xf32>
    %342 = vector.multi_reduction <add>, %341, %cst_83 [1] : vector<1x8xf32> to vector<1xf32>
    %343 = vector.shape_cast %342 : vector<1xf32> to vector<1x1xf32>
    %cst_84 = arith.constant 1.250000e-01 : f32
    %344 = vector.broadcast %cst_84 : f32 to vector<1x1xf32>
    %345 = arith.mulf %340, %344 : vector<1x1xf32>
    %cst_85 = arith.constant 1.250000e-01 : f32
    %346 = vector.broadcast %cst_85 : f32 to vector<1x1xf32>
    %347 = arith.mulf %343, %346 : vector<1x1xf32>
    %348 = arith.mulf %345, %345 : vector<1x1xf32>
    %349 = arith.subf %347, %348 : vector<1x1xf32>
    %cst_86 = arith.constant 0.000000e+00 : f32
    %350 = vector.broadcast %cst_86 : f32 to vector<1x1xf32>
    %351 = arith.maximumf %349, %350 : vector<1x1xf32>
    %cst_87 = arith.constant 9.99999974E-6 : f32
    %352 = vector.broadcast %cst_87 : f32 to vector<1x1xf32>
    %353 = arith.addf %351, %352 : vector<1x1xf32>
    %354 = math.rsqrt %353 : vector<1x1xf32>
    %355 = vector.broadcast %337 : f32 to vector<1x1xf32>
    %356 = arith.mulf %355, %354 : vector<1x1xf32>
    %357 = arith.mulf %345, %356 : vector<1x1xf32>
    %358 = vector.broadcast %338 : f32 to vector<1x1xf32>
    %359 = arith.subf %358, %357 : vector<1x1xf32>
    %360 = vector.broadcast %356 : vector<1x1xf32> to vector<1x8xf32>
    %361 = arith.mulf %336, %360 : vector<1x8xf32>
    %362 = vector.broadcast %359 : vector<1x1xf32> to vector<1x8xf32>
    %363 = arith.addf %361, %362 : vector<1x8xf32>
    %cst_88 = arith.constant 0.000000e+00 : f32
    %364 = vector.broadcast %cst_88 : f32 to vector<1x8xf32>
    %365 = arith.cmpf ogt, %264, %364 : vector<1x8xf32>
    %366 = math.exp %264 : vector<1x8xf32>
    %cst_89 = arith.constant 1.000000e+00 : f32
    %367 = vector.broadcast %cst_89 : f32 to vector<1x8xf32>
    %368 = arith.subf %366, %367 : vector<1x8xf32>
    %369 = arith.select %365, %264, %368 : vector<1x8xi1>, vector<1x8xf32>
    %c39 = arith.constant 39 : index
    %370 = memref.load %arg2[%c39] : memref<64xf32, #tpu.memory_space<smem>>
    %c43 = arith.constant 43 : index
    %371 = memref.load %arg2[%c43] : memref<64xf32, #tpu.memory_space<smem>>
    %cst_90 = arith.constant dense<0.000000e+00> : vector<1xf32>
    %372 = vector.multi_reduction <add>, %369, %cst_90 [1] : vector<1x8xf32> to vector<1xf32>
    %373 = vector.shape_cast %372 : vector<1xf32> to vector<1x1xf32>
    %374 = arith.mulf %369, %369 : vector<1x8xf32>
    %cst_91 = arith.constant dense<0.000000e+00> : vector<1xf32>
    %375 = vector.multi_reduction <add>, %374, %cst_91 [1] : vector<1x8xf32> to vector<1xf32>
    %376 = vector.shape_cast %375 : vector<1xf32> to vector<1x1xf32>
    %cst_92 = arith.constant 1.250000e-01 : f32
    %377 = vector.broadcast %cst_92 : f32 to vector<1x1xf32>
    %378 = arith.mulf %373, %377 : vector<1x1xf32>
    %cst_93 = arith.constant 1.250000e-01 : f32
    %379 = vector.broadcast %cst_93 : f32 to vector<1x1xf32>
    %380 = arith.mulf %376, %379 : vector<1x1xf32>
    %381 = arith.mulf %378, %378 : vector<1x1xf32>
    %382 = arith.subf %380, %381 : vector<1x1xf32>
    %cst_94 = arith.constant 0.000000e+00 : f32
    %383 = vector.broadcast %cst_94 : f32 to vector<1x1xf32>
    %384 = arith.maximumf %382, %383 : vector<1x1xf32>
    %cst_95 = arith.constant 9.99999974E-6 : f32
    %385 = vector.broadcast %cst_95 : f32 to vector<1x1xf32>
    %386 = arith.addf %384, %385 : vector<1x1xf32>
    %387 = math.rsqrt %386 : vector<1x1xf32>
    %388 = vector.broadcast %370 : f32 to vector<1x1xf32>
    %389 = arith.mulf %388, %387 : vector<1x1xf32>
    %390 = arith.mulf %378, %389 : vector<1x1xf32>
    %391 = vector.broadcast %371 : f32 to vector<1x1xf32>
    %392 = arith.subf %391, %390 : vector<1x1xf32>
    %393 = vector.broadcast %389 : vector<1x1xf32> to vector<1x8xf32>
    %394 = arith.mulf %369, %393 : vector<1x8xf32>
    %395 = vector.broadcast %392 : vector<1x1xf32> to vector<1x8xf32>
    %396 = arith.addf %394, %395 : vector<1x8xf32>
    %c44 = arith.constant 44 : index
    %397 = memref.load %arg2[%c44] : memref<64xf32, #tpu.memory_space<smem>>
    %398 = vector.broadcast %397 : f32 to vector<1x8xf32>
    %399 = arith.mulf %297, %398 : vector<1x8xf32>
    %c45 = arith.constant 45 : index
    %400 = memref.load %arg2[%c45] : memref<64xf32, #tpu.memory_space<smem>>
    %401 = vector.broadcast %400 : f32 to vector<1x8xf32>
    %402 = arith.mulf %330, %401 : vector<1x8xf32>
    %403 = arith.addf %399, %402 : vector<1x8xf32>
    %c46 = arith.constant 46 : index
    %404 = memref.load %arg2[%c46] : memref<64xf32, #tpu.memory_space<smem>>
    %405 = vector.broadcast %404 : f32 to vector<1x8xf32>
    %406 = arith.mulf %363, %405 : vector<1x8xf32>
    %407 = arith.addf %403, %406 : vector<1x8xf32>
    %c47 = arith.constant 47 : index
    %408 = memref.load %arg2[%c47] : memref<64xf32, #tpu.memory_space<smem>>
    %409 = vector.broadcast %408 : f32 to vector<1x8xf32>
    %410 = arith.mulf %396, %409 : vector<1x8xf32>
    %411 = arith.addf %407, %410 : vector<1x8xf32>
    %c52 = arith.constant 52 : index
    %412 = memref.load %arg2[%c52] : memref<64xf32, #tpu.memory_space<smem>>
    %413 = vector.broadcast %412 : f32 to vector<1x8xf32>
    %414 = arith.addf %411, %413 : vector<1x8xf32>
    %c48 = arith.constant 48 : index
    %415 = memref.load %arg2[%c48] : memref<64xf32, #tpu.memory_space<smem>>
    %416 = vector.broadcast %415 : f32 to vector<1x8xf32>
    %417 = arith.mulf %297, %416 : vector<1x8xf32>
    %c49 = arith.constant 49 : index
    %418 = memref.load %arg2[%c49] : memref<64xf32, #tpu.memory_space<smem>>
    %419 = vector.broadcast %418 : f32 to vector<1x8xf32>
    %420 = arith.mulf %330, %419 : vector<1x8xf32>
    %421 = arith.addf %417, %420 : vector<1x8xf32>
    %c50 = arith.constant 50 : index
    %422 = memref.load %arg2[%c50] : memref<64xf32, #tpu.memory_space<smem>>
    %423 = vector.broadcast %422 : f32 to vector<1x8xf32>
    %424 = arith.mulf %363, %423 : vector<1x8xf32>
    %425 = arith.addf %421, %424 : vector<1x8xf32>
    %c51 = arith.constant 51 : index
    %426 = memref.load %arg2[%c51] : memref<64xf32, #tpu.memory_space<smem>>
    %427 = vector.broadcast %426 : f32 to vector<1x8xf32>
    %428 = arith.mulf %396, %427 : vector<1x8xf32>
    %429 = arith.addf %425, %428 : vector<1x8xf32>
    %c53 = arith.constant 53 : index
    %430 = memref.load %arg2[%c53] : memref<64xf32, #tpu.memory_space<smem>>
    %431 = vector.broadcast %430 : f32 to vector<1x8xf32>
    %432 = arith.addf %429, %431 : vector<1x8xf32>
    %cst_96 = arith.constant 0.000000e+00 : f32
    %433 = vector.broadcast %cst_96 : f32 to vector<1x8xf32>
    %434 = arith.cmpf ogt, %414, %433 : vector<1x8xf32>
    %435 = math.exp %414 : vector<1x8xf32>
    %cst_97 = arith.constant 1.000000e+00 : f32
    %436 = vector.broadcast %cst_97 : f32 to vector<1x8xf32>
    %437 = arith.subf %435, %436 : vector<1x8xf32>
    %438 = arith.select %434, %414, %437 : vector<1x8xi1>, vector<1x8xf32>
    %c54 = arith.constant 54 : index
    %439 = memref.load %arg2[%c54] : memref<64xf32, #tpu.memory_space<smem>>
    %c56 = arith.constant 56 : index
    %440 = memref.load %arg2[%c56] : memref<64xf32, #tpu.memory_space<smem>>
    %cst_98 = arith.constant dense<0.000000e+00> : vector<1xf32>
    %441 = vector.multi_reduction <add>, %438, %cst_98 [1] : vector<1x8xf32> to vector<1xf32>
    %442 = vector.shape_cast %441 : vector<1xf32> to vector<1x1xf32>
    %443 = arith.mulf %438, %438 : vector<1x8xf32>
    %cst_99 = arith.constant dense<0.000000e+00> : vector<1xf32>
    %444 = vector.multi_reduction <add>, %443, %cst_99 [1] : vector<1x8xf32> to vector<1xf32>
    %445 = vector.shape_cast %444 : vector<1xf32> to vector<1x1xf32>
    %cst_100 = arith.constant 1.250000e-01 : f32
    %446 = vector.broadcast %cst_100 : f32 to vector<1x1xf32>
    %447 = arith.mulf %442, %446 : vector<1x1xf32>
    %cst_101 = arith.constant 1.250000e-01 : f32
    %448 = vector.broadcast %cst_101 : f32 to vector<1x1xf32>
    %449 = arith.mulf %445, %448 : vector<1x1xf32>
    %450 = arith.mulf %447, %447 : vector<1x1xf32>
    %451 = arith.subf %449, %450 : vector<1x1xf32>
    %cst_102 = arith.constant 0.000000e+00 : f32
    %452 = vector.broadcast %cst_102 : f32 to vector<1x1xf32>
    %453 = arith.maximumf %451, %452 : vector<1x1xf32>
    %cst_103 = arith.constant 9.99999974E-6 : f32
    %454 = vector.broadcast %cst_103 : f32 to vector<1x1xf32>
    %455 = arith.addf %453, %454 : vector<1x1xf32>
    %456 = math.rsqrt %455 : vector<1x1xf32>
    %457 = vector.broadcast %439 : f32 to vector<1x1xf32>
    %458 = arith.mulf %457, %456 : vector<1x1xf32>
    %459 = arith.mulf %447, %458 : vector<1x1xf32>
    %460 = vector.broadcast %440 : f32 to vector<1x1xf32>
    %461 = arith.subf %460, %459 : vector<1x1xf32>
    %462 = vector.broadcast %458 : vector<1x1xf32> to vector<1x8xf32>
    %463 = arith.mulf %438, %462 : vector<1x8xf32>
    %464 = vector.broadcast %461 : vector<1x1xf32> to vector<1x8xf32>
    %465 = arith.addf %463, %464 : vector<1x8xf32>
    %cst_104 = arith.constant 0.000000e+00 : f32
    %466 = vector.broadcast %cst_104 : f32 to vector<1x8xf32>
    %467 = arith.cmpf ogt, %432, %466 : vector<1x8xf32>
    %468 = math.exp %432 : vector<1x8xf32>
    %cst_105 = arith.constant 1.000000e+00 : f32
    %469 = vector.broadcast %cst_105 : f32 to vector<1x8xf32>
    %470 = arith.subf %468, %469 : vector<1x8xf32>
    %471 = arith.select %467, %432, %470 : vector<1x8xi1>, vector<1x8xf32>
    %c55 = arith.constant 55 : index
    %472 = memref.load %arg2[%c55] : memref<64xf32, #tpu.memory_space<smem>>
    %c57 = arith.constant 57 : index
    %473 = memref.load %arg2[%c57] : memref<64xf32, #tpu.memory_space<smem>>
    %cst_106 = arith.constant dense<0.000000e+00> : vector<1xf32>
    %474 = vector.multi_reduction <add>, %471, %cst_106 [1] : vector<1x8xf32> to vector<1xf32>
    %475 = vector.shape_cast %474 : vector<1xf32> to vector<1x1xf32>
    %476 = arith.mulf %471, %471 : vector<1x8xf32>
    %cst_107 = arith.constant dense<0.000000e+00> : vector<1xf32>
    %477 = vector.multi_reduction <add>, %476, %cst_107 [1] : vector<1x8xf32> to vector<1xf32>
    %478 = vector.shape_cast %477 : vector<1xf32> to vector<1x1xf32>
    %cst_108 = arith.constant 1.250000e-01 : f32
    %479 = vector.broadcast %cst_108 : f32 to vector<1x1xf32>
    %480 = arith.mulf %475, %479 : vector<1x1xf32>
    %cst_109 = arith.constant 1.250000e-01 : f32
    %481 = vector.broadcast %cst_109 : f32 to vector<1x1xf32>
    %482 = arith.mulf %478, %481 : vector<1x1xf32>
    %483 = arith.mulf %480, %480 : vector<1x1xf32>
    %484 = arith.subf %482, %483 : vector<1x1xf32>
    %cst_110 = arith.constant 0.000000e+00 : f32
    %485 = vector.broadcast %cst_110 : f32 to vector<1x1xf32>
    %486 = arith.maximumf %484, %485 : vector<1x1xf32>
    %cst_111 = arith.constant 9.99999974E-6 : f32
    %487 = vector.broadcast %cst_111 : f32 to vector<1x1xf32>
    %488 = arith.addf %486, %487 : vector<1x1xf32>
    %489 = math.rsqrt %488 : vector<1x1xf32>
    %490 = vector.broadcast %472 : f32 to vector<1x1xf32>
    %491 = arith.mulf %490, %489 : vector<1x1xf32>
    %492 = arith.mulf %480, %491 : vector<1x1xf32>
    %493 = vector.broadcast %473 : f32 to vector<1x1xf32>
    %494 = arith.subf %493, %492 : vector<1x1xf32>
    %495 = vector.broadcast %491 : vector<1x1xf32> to vector<1x8xf32>
    %496 = arith.mulf %471, %495 : vector<1x8xf32>
    %497 = vector.broadcast %494 : vector<1x1xf32> to vector<1x8xf32>
    %498 = arith.addf %496, %497 : vector<1x8xf32>
    %c58 = arith.constant 58 : index
    %499 = memref.load %arg2[%c58] : memref<64xf32, #tpu.memory_space<smem>>
    %500 = vector.broadcast %499 : f32 to vector<1x8xf32>
    %501 = arith.mulf %465, %500 : vector<1x8xf32>
    %c59 = arith.constant 59 : index
    %502 = memref.load %arg2[%c59] : memref<64xf32, #tpu.memory_space<smem>>
    %503 = vector.broadcast %502 : f32 to vector<1x8xf32>
    %504 = arith.mulf %498, %503 : vector<1x8xf32>
    %505 = arith.addf %501, %504 : vector<1x8xf32>
    %c60 = arith.constant 60 : index
    %506 = memref.load %arg2[%c60] : memref<64xf32, #tpu.memory_space<smem>>
    %507 = vector.broadcast %506 : f32 to vector<1x8xf32>
    %508 = arith.addf %505, %507 : vector<1x8xf32>
    %509 = arith.negf %508 : vector<1x8xf32>
    %510 = math.exp %509 : vector<1x8xf32>
    %cst_112 = arith.constant 1.000000e+00 : f32
    %511 = vector.broadcast %cst_112 : f32 to vector<1x8xf32>
    %512 = arith.addf %511, %510 : vector<1x8xf32>
    %513 = arith.divf %511, %512 : vector<1x8xf32>
    %c0_113 = arith.constant 0 : index
    %c0_114 = arith.constant 0 : index
    %514 = vector.load %arg3[%c0_113, %c0_114] : memref<1x8xf32, #tpu.memory_space<vmem>>, vector<1x8xf32>
    tpu.vector_store %arg3[%c0_113, %c0_114], %513 {strides = array<i32>} : memref<1x8xf32, #tpu.memory_space<vmem>>, vector<1x8xf32>,
    return
  }
}

</mosaic_0001>

<llo_original>
// kernel: net_forward.1
$region0: #{net_forward.1}
  #allocation0 [shape = 'u32[]', space=smem, size = 0x4, offset = 0x4, fixed_abs, tag = 'smem constant byte address 0x4 - core index']
  #allocation1 [shape = 'u32[72,128]{1,0:T(1,128)}', space=vmem, size = 0x9000, scoped, tag = 'internal scratch']
  %s0 = inlined_call_operand.hbm [shape: f32[8,9], index: 0, kind: input, shape index: {}]
  %s1 = inlined_call_operand.hbm [shape: f32[4,32,32], index: 1, kind: input, shape index: {}]
  %s2 = inlined_call_operand.vmem [shape: f32[64], index: 2, kind: input, shape index: {}]
  %s3 = inlined_call_operand.hbm [shape: f32[1,8], index: 3, kind: output, shape index: {}]
  %s4 = sld [smem:[#allocation0]]
  $region34: #{net_forward.1} parent=0
    _
  %s6 = ssub.s32 1, %s4
  %s7 = scalar_select 0, %s6, %s4
  $region1: #{net_forward.1} parent=0
    #allocation2 [shape = 'u8[4096]{0}', space=vmem, size = 0x1000, scoped, tag = 'input window, operand 0, single buffered']
    #allocation3 [shape = 's32[1]{0}', space=sflag, size = 0x4, scoped, tag = 'scoped memory for net_forward.1']
    #allocation4 [shape = 's32[1]{0}', space=sflag, size = 0x4, scoped, tag = 'scoped memory for net_forward.1']
    #allocation5 [shape = 's32[1]{0}', space=sflag, size = 0x4, scoped, tag = 'scoped memory for net_forward.1']
    #allocation6 [shape = 'u8[65536]{0}', space=vmem, size = 0x10000, scoped, tag = 'input window, operand 1, single buffered']
    #allocation7 [shape = 's32[1]{0}', space=sflag, size = 0x4, scoped, tag = 'scoped memory for net_forward.1']
    #allocation8 [shape = 'u8[512]{0}', space=smem, size = 0x200, scoped, tag = 'input window, operand 2, single buffered']
    #allocation9 [shape = 'u8[512]{0}', space=vmem, size = 0x400, scoped, tag = 'output window, operand 0, single buffered']
    %8 = vsyncpa [#allocation3], 0
    %9 = vsyncpa [#allocation7], 0
    %10 = vsyncpa [#allocation5], 0
    %11 = vsyncpa [#allocation4], 0
    // Predicated region
    $region2: #{net_forward.1} parent=1 // pred_check
      _
    $region3: #{net_forward.1} parent=1 // pred_check_branch
      %13 = sbr.rel (0) target = $region5
    $region4: #{net_forward.1} parent=1 // pred_region
      %15 = vsyncadd [#allocation3], 0
      %s17 = sshll.u32 %s0, 4
      %s18 = int_to_ptr.hbm [resolvable:$true] %s17
      %s19 = sshll.u32 [#allocation2], 4
      %s20 = int_to_ptr.vmem [resolvable:$true] %s19
      %22 = dma.hbm_to_vmem [thread:$0]  %s18, 128, %s20, [#allocation3]
    $region5: #{net_forward.1} parent=1 // pred_fallthru
      _
    // Predicated region
    $region6: #{net_forward.1} parent=1 // pred_check
      _
    $region7: #{net_forward.1} parent=1 // pred_check_branch
      %24 = sbr.rel (0) target = $region9
    $region8: #{net_forward.1} parent=1 // pred_region
      %26 = vsyncadd [#allocation7], 0
      %s27 = sshll.u32 %s1, 4
      %s28 = int_to_ptr.hbm [resolvable:$true] %s27
      %s29 = sshll.u32 [#allocation6], 4
      %s30 = int_to_ptr.vmem [resolvable:$true] %s29
      %35 = dma.hbm_to_vmem [thread:$0]  %s28, 2048, %s30, [#allocation7], 128, 128, 8
    $region9: #{net_forward.1} parent=1 // pred_fallthru
      _
    // Predicated region
    $region10: #{net_forward.1} parent=1 // pred_check
      _
    $region11: #{net_forward.1} parent=1 // pred_check_branch
      %37 = sbr.rel (0) target = $region13
    $region12: #{net_forward.1} parent=1 // pred_region
      %39 = vsyncadd [#allocation5], 0
      %s41 = sshll.u32 %s2, 4
      %s42 = int_to_ptr.vmem [resolvable:$true] %s41
      %44 = dma.vmem_to_smem %s42, 16, [#allocation8], [#allocation5]
    $region13: #{net_forward.1} parent=1 // pred_fallthru
      _
    // Predicated region
    $region14: #{net_forward.1} parent=1 // pred_check
      _
    $region15: #{net_forward.1} parent=1 // pred_check_branch
      %46 = sbr.rel (0) target = $region17
    $region16: #{net_forward.1} parent=1 // pred_region
      %48 = dma.done [#allocation3], 128
    $region17: #{net_forward.1} parent=1 // pred_fallthru
      _
    // Predicated region
    $region18: #{net_forward.1} parent=1 // pred_check
      _
    $region19: #{net_forward.1} parent=1 // pred_check_branch
      %50 = sbr.rel (0) target = $region21
    $region20: #{net_forward.1} parent=1 // pred_region
      %52 = dma.done [#allocation7], 2048
    $region21: #{net_forward.1} parent=1 // pred_fallthru
      _
    // Predicated region
    $region22: #{net_forward.1} parent=1 // pred_check
      _
    $region23: #{net_forward.1} parent=1 // pred_check_branch
      %54 = sbr.rel (0) target = $region25
    $region24: #{net_forward.1} parent=1 // pred_region
      %56 = dma.done [#allocation5], 16
    $region25: #{net_forward.1} parent=1 // pred_fallthru
      _
    %57 = sfence
    %v58 = vld [vmem:[#allocation2] sm:$0xff]
    %v59 = vld [vmem:[#allocation6] sm:$0xff]
    %v60 = vld [vmem:[#allocation6 + $0x8] sm:$0xff]
    %v61 = vld [vmem:[#allocation6 + $0x10] sm:$0xff]
    %v62 = vld [vmem:[#allocation6 + $0x18] sm:$0xff]
    %s63 = scalar_lea.vmem [#allocation6], 96
    %v64 = vld [vmem:[%s63] sm:$0xff]
    %v65 = vld [vmem:[%s63 + $0x8] sm:$0xff]
    %v66 = vld [vmem:[%s63 + $0x10] sm:$0xff]
    %v67 = vld [vmem:[%s63 + $0x18] sm:$0xff]
    %69 = vset.pattern.permute.xlu0 0
    %70 = vperm.xlu0 %69, %v64
    %v71 = vpop.permute.xlu0 %70
    %74 = vset.pattern.permute.xlu0 0
    %75 = vperm.xlu0 %74, %v65
    %v76 = vpop.permute.xlu0 %75
    %79 = vset.pattern.permute.xlu0 0
    %80 = vperm.xlu0 %79, %v66
    %v81 = vpop.permute.xlu0 %80
    %84 = vset.pattern.permute.xlu0 0
    %85 = vperm.xlu0 %84, %v67
    %v86 = vpop.permute.xlu0 %85
    %vm88 = vcmask 72704
    %v90 = vsel %vm88, %v59, 0
    %v93 = vsel %vm88, %v60, 0
    %v96 = vsel %vm88, %v61, 0
    %v99 = vsel %vm88, %v62, 0
    %v102 = vsel %vm88, %v58, 0
    %104 = vmatpush.xpose.msra.mxu0 0.0
    %105 = vmatpush.xpose.msra.mxu0 0.0
    %106 = vmatpush.xpose.msra.mxu0 0.0
    %107 = vmatpush.xpose.msra.mxu0 0.0
    %108 = vmatpush.xpose.msra.mxu0 0.0
    %109 = vmatpush.xpose.msra.mxu0 0.0
    %110 = vmatpush.xpose.msra.mxu0 0.0
    %111 = vmatpush.xpose.msra.mxu0 0.0
    %112 = vmatpush.xpose.msra.mxu0 0.0
    %113 = vmatpush.xpose.msra.mxu0 0.0
    %114 = vmatpush.xpose.msra.mxu0 0.0
    %115 = vmatpush.xpose.msra.mxu0 0.0
    %116 = vmatpush.xpose.msra.mxu0 0.0
    %117 = vmatpush.xpose.msra.mxu0 0.0
    %118 = vmatpush.xpose.msra.mxu0 0.0
    %119 = vmatpush.xpose.msra.mxu0 %v102
    %120 = vmatmul.f32.gmra.mxu0 %v90
    %v121 = vpop.f32.mrf.mxu0
    %v122 = vadd.f32 %v71, %v121
    %123 = vmatmul.f32.gmra.mxu0 %v93
    %v124 = vpop.f32.mrf.mxu0
    %v125 = vadd.f32 %v76, %v124
    %126 = vmatmul.f32.gmra.mxu0 %v96
    %v127 = vpop.f32.mrf.mxu0
    %v128 = vadd.f32 %v81, %v127
    %129 = vmatmul.f32.gmra.mxu0 %v99
    %v130 = vpop.f32.mrf.mxu0
    %v131 = vadd.f32 %v86, %v130
    %132 = vdwg.mxu0
    %vm133 = vcmp.gt.f32.partialorder %v122, 0.0
    %vm134 = vcmp.gt.f32.partialorder %v125, 0.0
    %vm135 = vcmp.gt.f32.partialorder %v128, 0.0
    %vm136 = vcmp.gt.f32.partialorder %v131, 0.0
    %v137 = vmul.f32 %v122, 1.442695
    %v138 = vpow.pop %v137
    %v139 = vmul.f32 %v125, 1.442695
    %v140 = vpow.pop %v139
    %v141 = vmul.f32 %v128, 1.442695
    %v142 = vpow.pop %v141
    %v143 = vmul.f32 %v131, 1.442695
    %v144 = vpow.pop %v143
    %v145 = vsub.f32 %v138, 1.0
    %v146 = vsub.f32 %v140, 1.0
    %v147 = vsub.f32 %v142, 1.0
    %v148 = vsub.f32 %v144, 1.0
    %v149 = vsel %vm133, %v122, %v145
    %v150 = vsel %vm134, %v125, %v146
    %v151 = vsel %vm135, %v128, %v147
    %v152 = vsel %vm136, %v131, %v148
    %vm153 = vcmask 64512
    %v154 = vsel %vm153, %v149, 0.0
    %155 = vadd.xlane.f32.xlu0 %v154
    %v156 = vpop.xlane.xlu0 %155
    %v157 = vsel %vm153, %v150, 0.0
    %158 = vadd.xlane.f32.xlu0 %v157
    %v159 = vpop.xlane.xlu0 %158
    %v160 = vsel %vm153, %v151, 0.0
    %161 = vadd.xlane.f32.xlu0 %v160
    %v162 = vpop.xlane.xlu0 %161
    %v163 = vsel %vm153, %v152, 0.0
    %164 = vadd.xlane.f32.xlu0 %v163
    %v165 = vpop.xlane.xlu0 %164
    %v166 = vmul.f32 %v149, %v149
    %v167 = vmul.f32 %v150, %v150
    %v168 = vmul.f32 %v151, %v151
    %v169 = vmul.f32 %v152, %v152
    %v170 = vsel %vm153, %v166, 0.0
    %171 = vadd.xlane.f32.xlu0 %v170
    %v172 = vpop.xlane.xlu0 %171
    %v173 = vsel %vm153, %v167, 0.0
    %174 = vadd.xlane.f32.xlu0 %v173
    %v175 = vpop.xlane.xlu0 %174
    %v176 = vsel %vm153, %v168, 0.0
    %177 = vadd.xlane.f32.xlu0 %v176
    %v178 = vpop.xlane.xlu0 %177
    %v179 = vsel %vm153, %v169, 0.0
    %180 = vadd.xlane.f32.xlu0 %v179
    %v181 = vpop.xlane.xlu0 %180
    %v182 = vmul.f32 %v156, 0.125
    %v183 = vmul.f32 %v159, 0.125
    %v184 = vmul.f32 %v162, 0.125
    %v185 = vmul.f32 %v165, 0.125
    %v186 = vmul.f32 %v172, 0.125
    %v187 = vmul.f32 %v175, 0.125
    %v188 = vmul.f32 %v178, 0.125
    %v189 = vmul.f32 %v181, 0.125
    %v190 = vmul.f32 %v182, %v182
    %v191 = vmul.f32 %v183, %v183
    %v192 = vmul.f32 %v184, %v184
    %v193 = vmul.f32 %v185, %v185
    %v194 = vsub.f32 %v186, %v190
    %v195 = vsub.f32 %v187, %v191
    %v196 = vsub.f32 %v188, %v192
    %v197 = vsub.f32 %v189, %v193
    %v198 = vmax.f32 %v194, 0.0
    %v199 = vmax.f32 %v195, 0.0
    %v200 = vmax.f32 %v196, 0.0
    %v201 = vmax.f32 %v197, 0.0
    %v202 = vadd.f32 %v198, 1e-05
    %v203 = vadd.f32 %v199, 1e-05
    %v204 = vadd.f32 %v200, 1e-05
    %v205 = vadd.f32 %v201, 1e-05
    %v206 = vrsqrt.pop %v202
    %v207 = vmul.f32 %v206, %v202
    %v208 = vmul.f32 %v207, %v206
    %v209 = vmul.f32 0.5, %v208
    %v210 = vsub.f32 1.5, %v209
    %v211 = vmul.f32 %v206, %v210
    %vm212 = vweird.f32 %v202
    %vm213 = vweird.f32 %v206
    %vm214 = vmor %vm212, %vm213
    %v215 = vsel %vm214, %v206, %v211
    %v216 = vrsqrt.pop %v203
    %v217 = vmul.f32 %v216, %v203
    %v218 = vmul.f32 %v217, %v216
    %v219 = vmul.f32 0.5, %v218
    %v220 = vsub.f32 1.5, %v219
    %v221 = vmul.f32 %v216, %v220
    %vm222 = vweird.f32 %v203
    %vm223 = vweird.f32 %v216
    %vm224 = vmor %vm222, %vm223
    %v225 = vsel %vm224, %v216, %v221
    %v226 = vrsqrt.pop %v204
    %v227 = vmul.f32 %v226, %v204
    %v228 = vmul.f32 %v227, %v226
    %v229 = vmul.f32 0.5, %v228
    %v230 = vsub.f32 1.5, %v229
    %v231 = vmul.f32 %v226, %v230
    %vm232 = vweird.f32 %v204
    %vm233 = vweird.f32 %v226
    %vm234 = vmor %vm232, %vm233
    %v235 = vsel %vm234, %v226, %v231
    %v236 = vrsqrt.pop %v205
    %v237 = vmul.f32 %v236, %v205
    %v238 = vmul.f32 %v237, %v236
    %v239 = vmul.f32 0.5, %v238
    %v240 = vsub.f32 1.5, %v239
    %v241 = vmul.f32 %v236, %v240
    %vm242 = vweird.f32 %v205
    %vm243 = vweird.f32 %v236
    %vm244 = vmor %vm242, %vm243
    %v245 = vsel %vm244, %v236, %v241
    %v246 = vmul.f32 %v64, %v215
    %v247 = vmul.f32 %v65, %v225
    %v248 = vmul.f32 %v66, %v235
    %v249 = vmul.f32 %v67, %v245
    %v250 = vmul.f32 %v182, %v246
    %v251 = vmul.f32 %v183, %v247
    %v252 = vmul.f32 %v184, %v248
    %v253 = vmul.f32 %v185, %v249
    %258 = vrot.lane.b32.xlu0 %v250, 3
    %v259 = vpop.permute.xlu0 %258
    %260 = vrot.lane.b32.xlu0 %v251, 3
    %v261 = vpop.permute.xlu0 %260
    %262 = vrot.lane.b32.xlu0 %v252, 3
    %v263 = vpop.permute.xlu0 %262
    %264 = vrot.lane.b32.xlu0 %v253, 3
    %v265 = vpop.permute.xlu0 %264
    %v270 = vsub.f32 %v64, %v259
    %v271 = vsub.f32 %v65, %v261
    %v272 = vsub.f32 %v66, %v263
    %v273 = vsub.f32 %v67, %v265
    %275 = vset.pattern.permute.xlu0 3
    %276 = vperm.xlu0 %275, %v246
    %v277 = vpop.permute.xlu0 %276
    %280 = vset.pattern.permute.xlu0 3
    %281 = vperm.xlu0 %280, %v247
    %v282 = vpop.permute.xlu0 %281
    %285 = vset.pattern.permute.xlu0 3
    %286 = vperm.xlu0 %285, %v248
    %v287 = vpop.permute.xlu0 %286
    %290 = vset.pattern.permute.xlu0 3
    %291 = vperm.xlu0 %290, %v249
    %v292 = vpop.permute.xlu0 %291
    %v294 = vmul.f32 %v149, %v277
    %v295 = vmul.f32 %v150, %v282
    %v296 = vmul.f32 %v151, %v287
    %v297 = vmul.f32 %v152, %v292
    %299 = vset.pattern.permute.xlu0 6
    %300 = vperm.xlu0 %299, %v270
    %v301 = vpop.permute.xlu0 %300
    %304 = vset.pattern.permute.xlu0 6
    %305 = vperm.xlu0 %304, %v271
    %v306 = vpop.permute.xlu0 %305
    %309 = vset.pattern.permute.xlu0 6
    %310 = vperm.xlu0 %309, %v272
    %v311 = vpop.permute.xlu0 %310
    %314 = vset.pattern.permute.xlu0 6
    %315 = vperm.xlu0 %314, %v273
    %v316 = vpop.permute.xlu0 %315
    %v318 = vadd.f32 %v294, %v301
    %v319 = vadd.f32 %v295, %v306
    %v320 = vadd.f32 %v296, %v311
    %v321 = vadd.f32 %v297, %v316
    %s322 = scalar_lea.vmem [#allocation6], 32
    %v323 = vld [vmem:[%s322] sm:$0xff]
    %v324 = vld [vmem:[%s322 + $0x8] sm:$0xff]
    %v325 = vld [vmem:[%s63] sm:$0xff]
    %v326 = vld [vmem:[%s63 + $0x8] sm:$0xff]
    %328 = vset.pattern.permute.xlu0 1
    %329 = vperm.xlu0 %328, %v325
    %v330 = vpop.permute.xlu0 %329
    %333 = vset.pattern.permute.xlu0 1
    %334 = vperm.xlu0 %333, %v326
    %v335 = vpop.permute.xlu0 %334
    %vm337 = vcmask 261120
    %v339 = vsel %vm337, %v323, 0
    %v342 = vsel %vm337, %v324, 0
    %344 = vmatpush.msra.mxu0 0.0
    %345 = vmatpush.msra.mxu0 0.0
    %346 = vmatpush.msra.mxu0 0.0
    %347 = vmatpush.msra.mxu0 0.0
    %348 = vmatpush.msra.mxu0 0.0
    %349 = vmatpush.msra.mxu0 0.0
    %350 = vmatpush.msra.mxu0 0.0
    %351 = vmatpush.msra.mxu0 0.0
    %352 = vmatpush.msra.mxu0 0.0
    %353 = vmatpush.msra.mxu0 0.0
    %354 = vmatpush.msra.mxu0 0.0
    %355 = vmatpush.msra.mxu0 0.0
    %356 = vmatpush.msra.mxu0 %v321
    %357 = vmatpush.msra.mxu0 %v320
    %358 = vmatpush.msra.mxu0 %v319
    %359 = vmatpush.msra.mxu0 %v318
    %360 = vmatmul.f32.gmra.mxu0 %v339
    %v361 = vpop.f32.mrf.mxu0
    %v362 = vadd.f32 %v330, %v361
    %363 = vmatmul.f32.gmra.mxu0 %v342
    %v364 = vpop.f32.mrf.mxu0
    %v365 = vadd.f32 %v335, %v364
    %366 = vdwg.mxu0
    %vm367 = vcmp.gt.f32.partialorder %v362, 0.0
    %vm368 = vcmp.gt.f32.partialorder %v365, 0.0
    %v369 = vmul.f32 %v362, 1.442695
    %v370 = vpow.pop %v369
    %v371 = vmul.f32 %v365, 1.442695
    %v372 = vpow.pop %v371
    %v373 = vsub.f32 %v370, 1.0
    %v374 = vsub.f32 %v372, 1.0
    %v375 = vsel %vm367, %v362, %v373
    %v376 = vsel %vm368, %v365, %v374
    %v377 = vsel %vm153, %v375, 0.0
    %378 = vadd.xlane.f32.xlu0 %v377
    %v379 = vpop.xlane.xlu0 %378
    %v380 = vsel %vm153, %v376, 0.0
    %381 = vadd.xlane.f32.xlu0 %v380
    %v382 = vpop.xlane.xlu0 %381
    %v383 = vmul.f32 %v375, %v375
    %v384 = vmul.f32 %v376, %v376
    %v385 = vsel %vm153, %v383, 0.0
    %386 = vadd.xlane.f32.xlu0 %v385
    %v387 = vpop.xlane.xlu0 %386
    %v388 = vsel %vm153, %v384, 0.0
    %389 = vadd.xlane.f32.xlu0 %v388
    %v390 = vpop.xlane.xlu0 %389
    %v391 = vmul.f32 %v379, 0.125
    %v392 = vmul.f32 %v382, 0.125
    %v393 = vmul.f32 %v387, 0.125
    %v394 = vmul.f32 %v390, 0.125
    %v395 = vmul.f32 %v391, %v391
    %v396 = vmul.f32 %v392, %v392
    %v397 = vsub.f32 %v393, %v395
    %v398 = vsub.f32 %v394, %v396
    %v399 = vmax.f32 %v397, 0.0
    %v400 = vmax.f32 %v398, 0.0
    %v401 = vadd.f32 %v399, 1e-05
    %v402 = vadd.f32 %v400, 1e-05
    %v403 = vrsqrt.pop %v401
    %v404 = vmul.f32 %v403, %v401
    %v405 = vmul.f32 %v404, %v403
    %v406 = vmul.f32 0.5, %v405
    %v407 = vsub.f32 1.5, %v406
    %v408 = vmul.f32 %v403, %v407
    %vm409 = vweird.f32 %v401
    %vm410 = vweird.f32 %v403
    %vm411 = vmor %vm409, %vm410
    %v412 = vsel %vm411, %v403, %v408
    %v413 = vrsqrt.pop %v402
    %v414 = vmul.f32 %v413, %v402
    %v415 = vmul.f32 %v414, %v413
    %v416 = vmul.f32 0.5, %v415
    %v417 = vsub.f32 1.5, %v416
    %v418 = vmul.f32 %v413, %v417
    %vm419 = vweird.f32 %v402
    %vm420 = vweird.f32 %v413
    %vm421 = vmor %vm419, %vm420
    %v422 = vsel %vm421, %v413, %v418
    %v423 = vmul.f32 %v325, %v412
    %v424 = vmul.f32 %v326, %v422
    %v425 = vmul.f32 %v391, %v423
    %v426 = vmul.f32 %v392, %v424
    %429 = vrot.lane.b32.xlu0 %v425, 3
    %v430 = vpop.permute.xlu0 %429
    %431 = vrot.lane.b32.xlu0 %v426, 3
    %v432 = vpop.permute.xlu0 %431
    %v435 = vsub.f32 %v325, %v430
    %v436 = vsub.f32 %v326, %v432
    %438 = vset.pattern.permute.xlu0 4
    %439 = vperm.xlu0 %438, %v423
    %v440 = vpop.permute.xlu0 %439
    %443 = vset.pattern.permute.xlu0 4
    %444 = vperm.xlu0 %443, %v424
    %v445 = vpop.permute.xlu0 %444
    %v447 = vmul.f32 %v375, %v440
    %v448 = vmul.f32 %v376, %v445
    %450 = vset.pattern.permute.xlu0 7
    %451 = vperm.xlu0 %450, %v435
    %v452 = vpop.permute.xlu0 %451
    %455 = vset.pattern.permute.xlu0 7
    %456 = vperm.xlu0 %455, %v436
    %v457 = vpop.permute.xlu0 %456
    %v459 = vadd.f32 %v447, %v452
    %v460 = vadd.f32 %v448, %v457
    %s461 = scalar_lea.vmem [#allocation6], 64
    %v462 = vld [vmem:[%s461] sm:$0xff]
    %v463 = vld [vmem:[%s63] sm:$0xff]
    %465 = vset.pattern.permute.xlu0 2
    %466 = vperm.xlu0 %465, %v463
    %v467 = vpop.permute.xlu0 %466
    %vm469 = vcmask 130048
    %v471 = vsel %vm469, %v462, 0
    %473 = vmatpush.msra.mxu0 0.0
    %474 = vmatpush.msra.mxu0 0.0
    %475 = vmatpush.msra.mxu0 0.0
    %476 = vmatpush.msra.mxu0 0.0
    %477 = vmatpush.msra.mxu0 0.0
    %478 = vmatpush.msra.mxu0 0.0
    %479 = vmatpush.msra.mxu0 0.0
    %480 = vmatpush.msra.mxu0 0.0
    %481 = vmatpush.msra.mxu0 0.0
    %482 = vmatpush.msra.mxu0 0.0
    %483 = vmatpush.msra.mxu0 0.0
    %484 = vmatpush.msra.mxu0 0.0
    %485 = vmatpush.msra.mxu0 0.0
    %486 = vmatpush.msra.mxu0 0.0
    %487 = vmatpush.msra.mxu0 %v460
    %488 = vmatpush.msra.mxu0 %v459
    %489 = vmatmul.f32.gmra.mxu0 %v471
    %v490 = vpop.f32.mrf.mxu0
    %v491 = vadd.f32 %v467, %v490
    %492 = vdwg.mxu0
    %vm493 = vcmp.gt.f32.partialorder %v491, 0.0
    %v494 = vmul.f32 %v491, 1.442695
    %v495 = vpow.pop %v494
    %v496 = vsub.f32 %v495, 1.0
    %v497 = vsel %vm493, %v491, %v496
    %v498 = vsel %vm153, %v497, 0.0
    %499 = vadd.xlane.f32.xlu0 %v498
    %v500 = vpop.xlane.xlu0 %499
    %v501 = vmul.f32 %v497, %v497
    %v502 = vsel %vm153, %v501, 0.0
    %503 = vadd.xlane.f32.xlu0 %v502
    %v504 = vpop.xlane.xlu0 %503
    %v505 = vmul.f32 %v500, 0.125
    %v506 = vmul.f32 %v504, 0.125
    %v507 = vmul.f32 %v505, %v505
    %v508 = vsub.f32 %v506, %v507
    %v509 = vmax.f32 %v508, 0.0
    %v510 = vadd.f32 %v509, 1e-05
    %v511 = vrsqrt.pop %v510
    %v512 = vmul.f32 %v511, %v510
    %v513 = vmul.f32 %v512, %v511
    %v514 = vmul.f32 0.5, %v513
    %v515 = vsub.f32 1.5, %v514
    %v516 = vmul.f32 %v511, %v515
    %vm517 = vweird.f32 %v510
    %vm518 = vweird.f32 %v511
    %vm519 = vmor %vm517, %vm518
    %v520 = vsel %vm519, %v511, %v516
    %v521 = vmul.f32 %v463, %v520
    %v522 = vmul.f32 %v505, %v521
    %524 = vrot.lane.b32.xlu0 %v522, 3
    %v525 = vpop.permute.xlu0 %524
    %v527 = vsub.f32 %v463, %v525
    %529 = vset.pattern.permute.xlu0 5
    %530 = vperm.xlu0 %529, %v521
    %v531 = vpop.permute.xlu0 %530
    %v533 = vmul.f32 %v497, %v531
    %535 = vset.pattern.permute.xlu0 8
    %536 = vperm.xlu0 %535, %v527
    %v537 = vpop.permute.xlu0 %536
    %v539 = vadd.f32 %v533, %v537
    %s540 = sld [smem:[#allocation8]]
    %v541 = vstv %s540
    %v542 = vmul.f32 %v539, %v541
    %s543 = sld [smem:[#allocation8 + $0x1]]
    %v544 = vstv %s543
    %v545 = vmul.f32 %v539, %v544
    %v547 = vrot.slane %v545, 1
    %v549 = vadd.f32 %v542, %v547
    %s550 = sld [smem:[#allocation8 + $0x2]]
    %v551 = vstv %s550
    %v552 = vmul.f32 %v539, %v551
    %v554 = vrot.slane %v552, 2
    %v556 = vadd.f32 %v549, %v554
    %s557 = sld [smem:[#allocation8 + $0x3]]
    %v558 = vstv %s557
    %v559 = vmul.f32 %v539, %v558
    %v561 = vrot.slane %v559, 3
    %v563 = vadd.f32 %v556, %v561
    %s564 = sld [smem:[#allocation8 + $0x4]]
    %v565 = vstv %s564
    %v566 = vmul.f32 %v539, %v565
    %v568 = vrot.slane %v566, 4
    %v570 = vadd.f32 %v563, %v568
    %s571 = sld [smem:[#allocation8 + $0x5]]
    %v572 = vstv %s571
    %v573 = vmul.f32 %v539, %v572
    %v575 = vrot.slane %v573, 5
    %v577 = vadd.f32 %v570, %v575
    %s578 = sld [smem:[#allocation8 + $0x6]]
    %v579 = vstv %s578
    %v580 = vmul.f32 %v539, %v579
    %v582 = vrot.slane %v580, 6
    %v584 = vadd.f32 %v577, %v582
    %s585 = sld [smem:[#allocation8 + $0x7]]
    %v586 = vstv %s585
    %v587 = vmul.f32 %v539, %v586
    %v589 = vrot.slane %v587, 7
    %v591 = vadd.f32 %v584, %v589
    %s592 = sld [smem:[#allocation8 + $0x20]]
    %v593 = vstv %s592
    %v594 = vadd.f32 %v591, %v593
    %s595 = sld [smem:[#allocation8 + $0x8]]
    %v596 = vstv %s595
    %v597 = vmul.f32 %v539, %v596
    %s598 = sld [smem:[#allocation8 + $0x9]]
    %v599 = vstv %s598
    %v600 = vmul.f32 %v539, %v599
    %v602 = vrot.slane %v600, 1
    %v604 = vadd.f32 %v597, %v602
    %s605 = sld [smem:[#allocation8 + $0xa]]
    %v606 = vstv %s605
    %v607 = vmul.f32 %v539, %v606
    %v609 = vrot.slane %v607, 2
    %v611 = vadd.f32 %v604, %v609
    %s612 = sld [smem:[#allocation8 + $0xb]]
    %v613 = vstv %s612
    %v614 = vmul.f32 %v539, %v613
    %v616 = vrot.slane %v614, 3
    %v618 = vadd.f32 %v611, %v616
    %s619 = sld [smem:[#allocation8 + $0xc]]
    %v620 = vstv %s619
    %v621 = vmul.f32 %v539, %v620
    %v623 = vrot.slane %v621, 4
    %v625 = vadd.f32 %v618, %v623
    %s626 = sld [smem:[#allocation8 + $0xd]]
    %v627 = vstv %s626
    %v628 = vmul.f32 %v539, %v627
    %v630 = vrot.slane %v628, 5
    %v632 = vadd.f32 %v625, %v630
    %s633 = sld [smem:[#allocation8 + $0xe]]
    %v634 = vstv %s633
    %v635 = vmul.f32 %v539, %v634
    %v637 = vrot.slane %v635, 6
    %v639 = vadd.f32 %v632, %v637
    %s640 = sld [smem:[#allocation8 + $0xf]]
    %v641 = vstv %s640
    %v642 = vmul.f32 %v539, %v641
    %v644 = vrot.slane %v642, 7
    %v646 = vadd.f32 %v639, %v644
    %s647 = sld [smem:[#allocation8 + $0x21]]
    %v648 = vstv %s647
    %v649 = vadd.f32 %v646, %v648
    %s650 = sld [smem:[#allocation8 + $0x10]]
    %v651 = vstv %s650
    %v652 = vmul.f32 %v539, %v651
    %s653 = sld [smem:[#allocation8 + $0x11]]
    %v654 = vstv %s653
    %v655 = vmul.f32 %v539, %v654
    %v657 = vrot.slane %v655, 1
    %v659 = vadd.f32 %v652, %v657
    %s660 = sld [smem:[#allocation8 + $0x12]]
    %v661 = vstv %s660
    %v662 = vmul.f32 %v539, %v661
    %v664 = vrot.slane %v662, 2
    %v666 = vadd.f32 %v659, %v664
    %s667 = sld [smem:[#allocation8 + $0x13]]
    %v668 = vstv %s667
    %v669 = vmul.f32 %v539, %v668
    %v671 = vrot.slane %v669, 3
    %v673 = vadd.f32 %v666, %v671
    %s674 = sld [smem:[#allocation8 + $0x14]]
    %v675 = vstv %s674
    %v676 = vmul.f32 %v539, %v675
    %v678 = vrot.slane %v676, 4
    %v680 = vadd.f32 %v673, %v678
    %s681 = sld [smem:[#allocation8 + $0x15]]
    %v682 = vstv %s681
    %v683 = vmul.f32 %v539, %v682
    %v685 = vrot.slane %v683, 5
    %v687 = vadd.f32 %v680, %v685
    %s688 = sld [smem:[#allocation8 + $0x16]]
    %v689 = vstv %s688
    %v690 = vmul.f32 %v539, %v689
    %v692 = vrot.slane %v690, 6
    %v694 = vadd.f32 %v687, %v692
    %s695 = sld [smem:[#allocation8 + $0x17]]
    %v696 = vstv %s695
    %v697 = vmul.f32 %v539, %v696
    %v699 = vrot.slane %v697, 7
    %v701 = vadd.f32 %v694, %v699
    %s702 = sld [smem:[#allocation8 + $0x22]]
    %v703 = vstv %s702
    %v704 = vadd.f32 %v701, %v703
    %s705 = sld [smem:[#allocation8 + $0x18]]
    %v706 = vstv %s705
    %v707 = vmul.f32 %v539, %v706
    %s708 = sld [smem:[#allocation8 + $0x19]]
    %v709 = vstv %s708
    %v710 = vmul.f32 %v539, %v709
    %v712 = vrot.slane %v710, 1
    %v714 = vadd.f32 %v707, %v712
    %s715 = sld [smem:[#allocation8 + $0x1a]]
    %v716 = vstv %s715
    %v717 = vmul.f32 %v539, %v716
    %v719 = vrot.slane %v717, 2
    %v721 = vadd.f32 %v714, %v719
    %s722 = sld [smem:[#allocation8 + $0x1b]]
    %v723 = vstv %s722
    %v724 = vmul.f32 %v539, %v723
    %v726 = vrot.slane %v724, 3
    %v728 = vadd.f32 %v721, %v726
    %s729 = sld [smem:[#allocation8 + $0x1c]]
    %v730 = vstv %s729
    %v731 = vmul.f32 %v539, %v730
    %v733 = vrot.slane %v731, 4
    %v735 = vadd.f32 %v728, %v733
    %s736 = sld [smem:[#allocation8 + $0x1d]]
    %v737 = vstv %s736
    %v738 = vmul.f32 %v539, %v737
    %v740 = vrot.slane %v738, 5
    %v742 = vadd.f32 %v735, %v740
    %s743 = sld [smem:[#allocation8 + $0x1e]]
    %v744 = vstv %s743
    %v745 = vmul.f32 %v539, %v744
    %v747 = vrot.slane %v745, 6
    %v749 = vadd.f32 %v742, %v747
    %s750 = sld [smem:[#allocation8 + $0x1f]]
    %v751 = vstv %s750
    %v752 = vmul.f32 %v539, %v751
    %v754 = vrot.slane %v752, 7
    %v756 = vadd.f32 %v749, %v754
    %s757 = sld [smem:[#allocation8 + $0x23]]
    %v758 = vstv %s757
    %v759 = vadd.f32 %v756, %v758
    %vm760 = vcmp.gt.f32.partialorder %v594, 0.0
    %v761 = vmul.f32 %v594, 1.442695
    %v762 = vpow.pop %v761
    %v763 = vsub.f32 %v762, 1.0
    %v764 = vsel %vm760, %v594, %v763
    %s765 = sld [smem:[#allocation8 + $0x24]]
    %s766 = sld [smem:[#allocation8 + $0x28]]
    %vm767 = vcmask 57344
    %v768 = vsel %vm767, %v764, 0.0
    %769 = vadd.xlane.f32.xlu0 %v768
    %v770 = vpop.xlane.xlu0 %769
    %v771 = vmul.f32 %v764, %v764
    %v772 = vsel %vm767, %v771, 0.0
    %773 = vadd.xlane.f32.xlu0 %v772
    %v774 = vpop.xlane.xlu0 %773
    %v775 = vmul.f32 %v770, 0.125
    %v776 = vmul.f32 %v774, 0.125
    %v777 = vmul.f32 %v775, %v775
    %v778 = vsub.f32 %v776, %v777
    %v779 = vmax.f32 %v778, 0.0
    %v780 = vadd.f32 %v779, 1e-05
    %v781 = vrsqrt.pop %v780
    %v782 = vmul.f32 %v781, %v780
    %v783 = vmul.f32 %v782, %v781
    %v784 = vmul.f32 0.5, %v783
    %v785 = vsub.f32 1.5, %v784
    %v786 = vmul.f32 %v781, %v785
    %vm787 = vweird.f32 %v780
    %vm788 = vweird.f32 %v781
    %vm789 = vmor %vm787, %vm788
    %v790 = vsel %vm789, %v781, %v786
    %v791 = vstv %s765
    %v792 = vmul.f32 %v791, %v790
    %v793 = vmul.f32 %v775, %v792
    %v794 = vstv %s766
    %v795 = vsub.f32 %v794, %v793
    %v796 = vmul.f32 %v764, %v792
    %v797 = vadd.f32 %v796, %v795
    %vm798 = vcmp.gt.f32.partialorder %v649, 0.0
    %v799 = vmul.f32 %v649, 1.442695
    %v800 = vpow.pop %v799
    %v801 = vsub.f32 %v800, 1.0
    %v802 = vsel %vm798, %v649, %v801
    %s803 = sld [smem:[#allocation8 + $0x25]]
    %s804 = sld [smem:[#allocation8 + $0x29]]
    %v805 = vsel %vm767, %v802, 0.0
    %806 = vadd.xlane.f32.xlu0 %v805
    %v807 = vpop.xlane.xlu0 %806
    %v808 = vmul.f32 %v802, %v802
    %v809 = vsel %vm767, %v808, 0.0
    %810 = vadd.xlane.f32.xlu0 %v809
    %v811 = vpop.xlane.xlu0 %810
    %v812 = vmul.f32 %v807, 0.125
    %v813 = vmul.f32 %v811, 0.125
    %v814 = vmul.f32 %v812, %v812
    %v815 = vsub.f32 %v813, %v814
    %v816 = vmax.f32 %v815, 0.0
    %v817 = vadd.f32 %v816, 1e-05
    %v818 = vrsqrt.pop %v817
    %v819 = vmul.f32 %v818, %v817
    %v820 = vmul.f32 %v819, %v818
    %v821 = vmul.f32 0.5, %v820
    %v822 = vsub.f32 1.5, %v821
    %v823 = vmul.f32 %v818, %v822
    %vm824 = vweird.f32 %v817
    %vm825 = vweird.f32 %v818
    %vm826 = vmor %vm824, %vm825
    %v827 = vsel %vm826, %v818, %v823
    %v828 = vstv %s803
    %v829 = vmul.f32 %v828, %v827
    %v830 = vmul.f32 %v812, %v829
    %v831 = vstv %s804
    %v832 = vsub.f32 %v831, %v830
    %v833 = vmul.f32 %v802, %v829
    %v834 = vadd.f32 %v833, %v832
    %vm835 = vcmp.gt.f32.partialorder %v704, 0.0
    %v836 = vmul.f32 %v704, 1.442695
    %v837 = vpow.pop %v836
    %v838 = vsub.f32 %v837, 1.0
    %v839 = vsel %vm835, %v704, %v838
    %s840 = sld [smem:[#allocation8 + $0x26]]
    %s841 = sld [smem:[#allocation8 + $0x2a]]
    %v842 = vsel %vm767, %v839, 0.0
    %843 = vadd.xlane.f32.xlu0 %v842
    %v844 = vpop.xlane.xlu0 %843
    %v845 = vmul.f32 %v839, %v839
    %v846 = vsel %vm767, %v845, 0.0
    %847 = vadd.xlane.f32.xlu0 %v846
    %v848 = vpop.xlane.xlu0 %847
    %v849 = vmul.f32 %v844, 0.125
    %v850 = vmul.f32 %v848, 0.125
    %v851 = vmul.f32 %v849, %v849
    %v852 = vsub.f32 %v850, %v851
    %v853 = vmax.f32 %v852, 0.0
    %v854 = vadd.f32 %v853, 1e-05
    %v855 = vrsqrt.pop %v854
    %v856 = vmul.f32 %v855, %v854
    %v857 = vmul.f32 %v856, %v855
    %v858 = vmul.f32 0.5, %v857
    %v859 = vsub.f32 1.5, %v858
    %v860 = vmul.f32 %v855, %v859
    %vm861 = vweird.f32 %v854
    %vm862 = vweird.f32 %v855
    %vm863 = vmor %vm861, %vm862
    %v864 = vsel %vm863, %v855, %v860
    %v865 = vstv %s840
    %v866 = vmul.f32 %v865, %v864
    %v867 = vmul.f32 %v849, %v866
    %v868 = vstv %s841
    %v869 = vsub.f32 %v868, %v867
    %v870 = vmul.f32 %v839, %v866
    %v871 = vadd.f32 %v870, %v869
    %vm872 = vcmp.gt.f32.partialorder %v759, 0.0
    %v873 = vmul.f32 %v759, 1.442695
    %v874 = vpow.pop %v873
    %v875 = vsub.f32 %v874, 1.0
    %v876 = vsel %vm872, %v759, %v875
    %s877 = sld [smem:[#allocation8 + $0x27]]
    %s878 = sld [smem:[#allocation8 + $0x2b]]
    %v879 = vsel %vm767, %v876, 0.0
    %880 = vadd.xlane.f32.xlu0 %v879
    %v881 = vpop.xlane.xlu0 %880
    %v882 = vmul.f32 %v876, %v876
    %v883 = vsel %vm767, %v882, 0.0
    %884 = vadd.xlane.f32.xlu0 %v883
    %v885 = vpop.xlane.xlu0 %884
    %v886 = vmul.f32 %v881, 0.125
    %v887 = vmul.f32 %v885, 0.125
    %v888 = vmul.f32 %v886, %v886
    %v889 = vsub.f32 %v887, %v888
    %v890 = vmax.f32 %v889, 0.0
    %v891 = vadd.f32 %v890, 1e-05
    %v892 = vrsqrt.pop %v891
    %v893 = vmul.f32 %v892, %v891
    %v894 = vmul.f32 %v893, %v892
    %v895 = vmul.f32 0.5, %v894
    %v896 = vsub.f32 1.5, %v895
    %v897 = vmul.f32 %v892, %v896
    %vm898 = vweird.f32 %v891
    %vm899 = vweird.f32 %v892
    %vm900 = vmor %vm898, %vm899
    %v901 = vsel %vm900, %v892, %v897
    %v902 = vstv %s877
    %v903 = vmul.f32 %v902, %v901
    %v904 = vmul.f32 %v886, %v903
    %v905 = vstv %s878
    %v906 = vsub.f32 %v905, %v904
    %v907 = vmul.f32 %v876, %v903
    %v908 = vadd.f32 %v907, %v906
    %s909 = sld [smem:[#allocation8 + $0x2c]]
    %v910 = vstv %s909
    %v911 = vmul.f32 %v797, %v910
    %s912 = sld [smem:[#allocation8 + $0x2d]]
    %v913 = vstv %s912
    %v914 = vmul.f32 %v834, %v913
    %v915 = vadd.f32 %v911, %v914
    %s916 = sld [smem:[#allocation8 + $0x2e]]
    %v917 = vstv %s916
    %v918 = vmul.f32 %v871, %v917
    %v919 = vadd.f32 %v915, %v918
    %s920 = sld [smem:[#allocation8 + $0x2f]]
    %v921 = vstv %s920
    %v922 = vmul.f32 %v908, %v921
    %v923 = vadd.f32 %v919, %v922
    %s924 = sld [smem:[#allocation8 + $0x34]]
    %v925 = vstv %s924
    %v926 = vadd.f32 %v923, %v925
    %s927 = sld [smem:[#allocation8 + $0x30]]
    %v928 = vstv %s927
    %v929 = vmul.f32 %v797, %v928
    %s930 = sld [smem:[#allocation8 + $0x31]]
    %v931 = vstv %s930
    %v932 = vmul.f32 %v834, %v931
    %v933 = vadd.f32 %v929, %v932
    %s934 = sld [smem:[#allocation8 + $0x32]]
    %v935 = vstv %s934
    %v936 = vmul.f32 %v871, %v935
    %v937 = vadd.f32 %v933, %v936
    %s938 = sld [smem:[#allocation8 + $0x33]]
    %v939 = vstv %s938
    %v940 = vmul.f32 %v908, %v939
    %v941 = vadd.f32 %v937, %v940
    %s942 = sld [smem:[#allocation8 + $0x35]]
    %v943 = vstv %s942
    %v944 = vadd.f32 %v941, %v943
    %vm945 = vcmp.gt.f32.partialorder %v926, 0.0
    %v946 = vmul.f32 %v926, 1.442695
    %v947 = vpow.pop %v946
    %v948 = vsub.f32 %v947, 1.0
    %v949 = vsel %vm945, %v926, %v948
    %s950 = sld [smem:[#allocation8 + $0x36]]
    %s951 = sld [smem:[#allocation8 + $0x38]]
    %v952 = vsel %vm767, %v949, 0.0
    %953 = vadd.xlane.f32.xlu0 %v952
    %v954 = vpop.xlane.xlu0 %953
    %v955 = vmul.f32 %v949, %v949
    %v956 = vsel %vm767, %v955, 0.0
    %957 = vadd.xlane.f32.xlu0 %v956
    %v958 = vpop.xlane.xlu0 %957
    %v959 = vmul.f32 %v954, 0.125
    %v960 = vmul.f32 %v958, 0.125
    %v961 = vmul.f32 %v959, %v959
    %v962 = vsub.f32 %v960, %v961
    %v963 = vmax.f32 %v962, 0.0
    %v964 = vadd.f32 %v963, 1e-05
    %v965 = vrsqrt.pop %v964
    %v966 = vmul.f32 %v965, %v964
    %v967 = vmul.f32 %v966, %v965
    %v968 = vmul.f32 0.5, %v967
    %v969 = vsub.f32 1.5, %v968
    %v970 = vmul.f32 %v965, %v969
    %vm971 = vweird.f32 %v964
    %vm972 = vweird.f32 %v965
    %vm973 = vmor %vm971, %vm972
    %v974 = vsel %vm973, %v965, %v970
    %v975 = vstv %s950
    %v976 = vmul.f32 %v975, %v974
    %v977 = vmul.f32 %v959, %v976
    %v978 = vstv %s951
    %v979 = vsub.f32 %v978, %v977
    %v980 = vmul.f32 %v949, %v976
    %v981 = vadd.f32 %v980, %v979
    %vm982 = vcmp.gt.f32.partialorder %v944, 0.0
    %v983 = vmul.f32 %v944, 1.442695
    %v984 = vpow.pop %v983
    %v985 = vsub.f32 %v984, 1.0
    %v986 = vsel %vm982, %v944, %v985
    %s987 = sld [smem:[#allocation8 + $0x37]]
    %s988 = sld [smem:[#allocation8 + $0x39]]
    %v989 = vsel %vm767, %v986, 0.0
    %990 = vadd.xlane.f32.xlu0 %v989
    %v991 = vpop.xlane.xlu0 %990
    %v992 = vmul.f32 %v986, %v986
    %v993 = vsel %vm767, %v992, 0.0
    %994 = vadd.xlane.f32.xlu0 %v993
    %v995 = vpop.xlane.xlu0 %994
    %v996 = vmul.f32 %v991, 0.125
    %v997 = vmul.f32 %v995, 0.125
    %v998 = vmul.f32 %v996, %v996
    %v999 = vsub.f32 %v997, %v998
    %v1000 = vmax.f32 %v999, 0.0
    %v1001 = vadd.f32 %v1000, 1e-05
    %v1002 = vrsqrt.pop %v1001
    %v1003 = vmul.f32 %v1002, %v1001
    %v1004 = vmul.f32 %v1003, %v1002
    %v1005 = vmul.f32 0.5, %v1004
    %v1006 = vsub.f32 1.5, %v1005
    %v1007 = vmul.f32 %v1002, %v1006
    %vm1008 = vweird.f32 %v1001
    %vm1009 = vweird.f32 %v1002
    %vm1010 = vmor %vm1008, %vm1009
    %v1011 = vsel %vm1010, %v1002, %v1007
    %v1012 = vstv %s987
    %v1013 = vmul.f32 %v1012, %v1011
    %v1014 = vmul.f32 %v996, %v1013
    %v1015 = vstv %s988
    %v1016 = vsub.f32 %v1015, %v1014
    %v1017 = vmul.f32 %v986, %v1013
    %v1018 = vadd.f32 %v1017, %v1016
    %s1019 = sld [smem:[#allocation8 + $0x3a]]
    %v1020 = vstv %s1019
    %v1021 = vmul.f32 %v981, %v1020
    %s1022 = sld [smem:[#allocation8 + $0x3b]]
    %v1023 = vstv %s1022
    %v1024 = vmul.f32 %v1018, %v1023
    %v1025 = vadd.f32 %v1021, %v1024
    %s1026 = sld [smem:[#allocation8 + $0x3c]]
    %v1027 = vstv %s1026
    %v1028 = vadd.f32 %v1025, %v1027
    %v1029 = vxor.u32 %v1028, 2147483648
    %v1030 = vmul.f32 %v1029, 1.442695
    %v1031 = vpow.pop %v1030
    %v1032 = vadd.f32 %v1031, 1.0
    %v1033 = vrcp.pop %v1032
    %v1034 = vmul.f32 %v1032, %v1033
    %v1035 = vsub.f32 1.0, %v1034
    %v1036 = vmul.f32 %v1033, %v1035
    %v1037 = vadd.f32 %v1033, %v1036
    %vm1038 = vweird.f32 %v1032
    %vm1039 = vweird.f32 %v1033
    %vm1040 = vmor %vm1038, %vm1039
    %v1041 = vsel %vm1040, %v1033, %v1037
    %v1042 = vand.u32 2147483647, %v1032
    %vm1043 = vcmp.eq.f32.partialorder %v1042, 8.507059e+37
    %v1044 = vand.u32 %v1032, 2147483648
    %v1045 = vor.u32 1.1754944e-38, %v1044
    %v1046 = vsel %vm1043, %v1045, %v1041
    %v1047 = vmul.f32 1.0, %v1046
    %1048 = vst.msk [vmem:[#allocation9] sm:$0x1] %vm767, %v1047
    // Predicated region
    $region26: #{net_forward.1} parent=1 // pred_check
      _
    $region27: #{net_forward.1} parent=1 // pred_check_branch
      %1050 = sbr.rel (0) target = $region29
    $region28: #{net_forward.1} parent=1 // pred_region
      %1052 = vsyncadd [#allocation4], 0
      %s1054 = sshll.u32 [#allocation9], 4
      %s1055 = int_to_ptr.vmem [resolvable:$true] %s1054
      %s1056 = sshll.u32 %s3, 4
      %s1057 = int_to_ptr.hbm [resolvable:$true] %s1056
      %1059 = dma.vmem_to_hbm [thread:$0]  %s1055, 16, %s1057, [#allocation4]
    $region29: #{net_forward.1} parent=1 // pred_fallthru
      _
    // Predicated region
    $region30: #{net_forward.1} parent=1 // pred_check
      _
    $region31: #{net_forward.1} parent=1 // pred_check_branch
      %1061 = sbr.rel (0) target = $region33
    $region32: #{net_forward.1} parent=1 // pred_region
      %1063 = dma.done [#allocation4], 16
    $region33: #{net_forward.1} parent=1 // pred_fallthru
      _
    %1064 = vsyncpa [#allocation3], 1
    %1065 = vsyncpa [#allocation7], 1
    %1066 = vsyncpa [#allocation4], 1
    %1067 = vsyncpa [#allocation5], 1

</llo_original>
